<compile_context>
chip_gen: v7x
topology: tpu7x:2x2x1
jax: 0.10.0
libtpu: 0.0.40
codegen_flags: <defaults>
</compile_context>

<pallas_src>
import functools

import jax
import jax.numpy as jnp
from jax.experimental import pallas as pl
from jax.experimental.pallas import tpu as pltpu


# --------------------------------------------------------------------------
# Fused kernel: 2-layer LSTM (wavefront) + last-timestep linear head
# --------------------------------------------------------------------------
def _feature_lstm_kernel(x_ref, wih0_ref, whh0_ref, b0_ref,
                         wih1_ref, whh1_ref, b1_ref,
                         wlin_ref, blin_ref, out_ref, *, T, B, H):
    """x_ref: (T*B, D) time-major, already flattened in the wrapper.

    All weights pre-transposed for right-multiplication (x @ W); b* hold the
    folded b_ih + b_hh.  wlin/blin/out are zero-padded to 128 lanes.
    """
    whh0 = whh0_ref[...]                     # (H, 4H)
    whh1 = whh1_ref[...]                     # (H, 4H)
    wih1 = wih1_ref[...]                     # (H, 4H)
    b1 = b1_ref[...]                         # (1, 4H)

    # ---- layer 0 input projection for ALL timesteps: one MXU matmul ----
    xp0 = jnp.dot(x_ref[...], wih0_ref[...],
                  preferred_element_type=jnp.float32) + b0_ref[...]   # (T*B, 4H)

    def cell(g, c):
        # Stable whole-vreg sigmoid: sigma(z) = 0.5*(tanh(z/2)+1)  (1 EUP op
        # on the full (B,4H) tile), then static lane slices for i/f/o.
        sg = 0.5 * (jnp.tanh(0.5 * g) + 1.0)
        i = sg[:, 0 * H:1 * H]
        f = sg[:, 1 * H:2 * H]
        o = sg[:, 3 * H:4 * H]
        gg = jnp.tanh(g[:, 2 * H:3 * H])
        c_new = f * c + i * gg
        h_new = o * jnp.tanh(c_new)
        return h_new, c_new

    zeros = jnp.zeros((B, H), jnp.float32)
    h0, c0 = zeros, zeros
    h1, c1 = zeros, zeros

    # ---- wavefront: unrolled step t runs layer-0 step t and layer-1 step t-1.
    # The two half-steps are data-independent, so the scheduler overlaps them.
    xp1_t = None
    for t in range(T):                                    # static unroll, T small
        g0 = xp0[t * B:(t + 1) * B, :] + jnp.dot(
            h0, whh0, preferred_element_type=jnp.float32)             # (B, 4H)
        h0, c0 = cell(g0, c0)
        if t > 0:
            g1 = xp1_t + jnp.dot(h1, whh1,
                                 preferred_element_type=jnp.float32)
            h1, c1 = cell(g1, c1)
        # layer-1 input projection of h0_t, consumed at the next iteration
        xp1_t = jnp.dot(h0, wih1, preferred_element_type=jnp.float32) + b1

    # drain: final layer-1 step (t = T-1)
    g1 = xp1_t + jnp.dot(h1, whh1, preferred_element_type=jnp.float32)
    h1, _ = cell(g1, c1)

    # ---- classifier head (lane-dense padded output) ----
    logits = jnp.dot(h1, wlin_ref[...],
                     preferred_element_type=jnp.float32) + blin_ref[...]
    out_ref[...] = logits.astype(out_ref.dtype)


# --------------------------------------------------------------------------
# Wrapper
# --------------------------------------------------------------------------
def feature_lstm_forward(x, params):
    """x: (B, T, input_dim) float32 (batch_first) -> (B, num_ragas) float32."""
    B, T, D = x.shape
    H = params["w_hh_l0"].shape[1]
    R = params["w_lin"].shape[0]
    H4 = 4 * H
    RP = max(128, ((R + 127) // 128) * 128)   # lane-dense padded logits width

    # TODO(synk): Dropout on the input is identity (inference mode).
    # Flatten (B,T,D) -> time-major (T*B, D) in XLA (free), not in-kernel.
    xt = jnp.transpose(x, (1, 0, 2)).astype(jnp.float32).reshape(T * B, D)

    # kernel-friendly layouts: right-multiply weights, fold both biases once
    wih0 = params["w_ih_l0"].T.astype(jnp.float32)              # (D, 4H)
    whh0 = params["w_hh_l0"].T.astype(jnp.float32)              # (H, 4H)
    b0 = (params["b_ih_l0"] + params["b_hh_l0"]).reshape(1, H4).astype(jnp.float32)
    wih1 = params["w_ih_l1"].T.astype(jnp.float32)              # (H, 4H)
    whh1 = params["w_hh_l1"].T.astype(jnp.float32)              # (H, 4H)
    b1 = (params["b_ih_l1"] + params["b_hh_l1"]).reshape(1, H4).astype(jnp.float32)

    # zero-pad the classifier to a lane-dense 128-wide output slab
    wlin = jnp.zeros((H, RP), jnp.float32).at[:, :R].set(
        params["w_lin"].T.astype(jnp.float32))
    blin = jnp.zeros((1, RP), jnp.float32).at[:, :R].set(
        params["b_lin"].reshape(1, R).astype(jnp.float32))

    flops = 2 * T * B * (D * H4 + 3 * H * H4) + 2 * B * H * RP
    transcend = 2 * T * B * 3 * H4              # ~3 tanh per cell step
    bytes_accessed = 4 * (xt.size + wih0.size + whh0.size + b0.size +
                          wih1.size + whh1.size + b1.size + wlin.size +
                          blin.size + B * RP)

    def full_spec(shape):
        nd = len(shape)
        return pl.BlockSpec(shape, lambda i: (0,) * nd)

    kernel = functools.partial(_feature_lstm_kernel, T=T, B=B, H=H)
    out_padded = pl.pallas_call(
        kernel,
        out_shape=jax.ShapeDtypeStruct((B, RP), jnp.float32),
        grid=(1,),
        in_specs=[
            full_spec((T * B, D)),
            full_spec((D, H4)), full_spec((H, H4)), full_spec((1, H4)),
            full_spec((H, H4)), full_spec((H, H4)), full_spec((1, H4)),
            full_spec((H, RP)), full_spec((1, RP)),
        ],
        out_specs=full_spec((B, RP)),
        compiler_params=pltpu.CompilerParams(
            dimension_semantics=("arbitrary",)),
        cost_estimate=pl.CostEstimate(flops=int(flops),
                                      transcendentals=int(transcend),
                                      bytes_accessed=int(bytes_accessed)),
    )(xt, wih0, whh0, b0, wih1, whh1, b1, wlin, blin)

    return out_padded[:, :R]


# --------------------------------------------------------------------------
# Parameters (PyTorch-style init) and pure-JAX reference
# --------------------------------------------------------------------------
def init_params(key, input_dim, hidden_dim, num_ragas):
    bound = 1.0 / (hidden_dim ** 0.5)
    keys = jax.random.split(key, 10)
    u = lambda k, shape: jax.random.uniform(k, shape, jnp.float32, -bound, bound)
    H4 = 4 * hidden_dim
    return {
        "w_ih_l0": u(keys[0], (H4, input_dim)),
        "w_hh_l0": u(keys[1], (H4, hidden_dim)),
        "b_ih_l0": u(keys[2], (H4,)),
        "b_hh_l0": u(keys[3], (H4,)),
        "w_ih_l1": u(keys[4], (H4, hidden_dim)),
        "w_hh_l1": u(keys[5], (H4, hidden_dim)),
        "b_ih_l1": u(keys[6], (H4,)),
        "b_hh_l1": u(keys[7], (H4,)),
        "w_lin": u(keys[8], (num_ragas, hidden_dim)),
        "b_lin": u(keys[9], (num_ragas,)),
    }


def _lstm_layer_ref(x, w_ih, w_hh, b_ih, b_hh):
    B, T, _ = x.shape
    H = w_hh.shape[1]
    h = jnp.zeros((B, H), jnp.float32)
    c = jnp.zeros((B, H), jnp.float32)
    outs = []
    for t in range(T):
        g = x[:, t] @ w_ih.T + b_ih + h @ w_hh.T + b_hh
        i, f, gg, o = jnp.split(g, 4, axis=-1)
        c = jax.nn.sigmoid(f) * c + jax.nn.sigmoid(i) * jnp.tanh(gg)
        h = jax.nn.sigmoid(o) * jnp.tanh(c)
        outs.append(h)
    return jnp.stack(outs, axis=1)          # (B, T, H)


def feature_lstm_ref(x, params):
    h0 = _lstm_layer_ref(x, params["w_ih_l0"], params["w_hh_l0"],
                         params["b_ih_l0"], params["b_hh_l0"])
    h1 = _lstm_layer_ref(h0, params["w_ih_l1"], params["w_hh_l1"],
                         params["b_ih_l1"], params["b_hh_l1"])
    return h1[:, -1, :] @ params["w_lin"].T + params["b_lin"]


# --------------------------------------------------------------------------
if __name__ == "__main__":
    batch, seq, input_dim, hidden_dim, num_ragas = 2, 8, 16, 32, 10

    key = jax.random.PRNGKey(0)
    kx, kp = jax.random.split(key)
    x = jax.random.normal(kx, (batch, seq, input_dim), jnp.float32)
    params = init_params(kp, input_dim, hidden_dim, num_ragas)

    out = jax.block_until_ready(feature_lstm_forward(x, params))
    ref = jax.block_until_ready(feature_lstm_ref(x, params))

    assert out.shape == (batch, num_ragas), out.shape
    assert jnp.allclose(out, ref, rtol=1e-3, atol=1e-3), (
        float(jnp.max(jnp.abs(out - ref))))
    print("KERNEL_OK")
</pallas_src>

<mosaic_0001>
module attributes {stable_mosaic.version = 11 : i64} {
  func.func @_feature_lstm_kernel(%arg0: i32, %arg1: memref<16x16xf32, #tpu.memory_space<vmem>>, %arg2: memref<16x128xf32, #tpu.memory_space<vmem>>, %arg3: memref<32x128xf32, #tpu.memory_space<vmem>>, %arg4: memref<1x128xf32, #tpu.memory_space<vmem>>, %arg5: memref<32x128xf32, #tpu.memory_space<vmem>>, %arg6: memref<32x128xf32, #tpu.memory_space<vmem>>, %arg7: memref<1x128xf32, #tpu.memory_space<vmem>>, %arg8: memref<32x128xf32, #tpu.memory_space<vmem>>, %arg9: memref<1x128xf32, #tpu.memory_space<vmem>>, %arg10: memref<2x128xf32, #tpu.memory_space<vmem>>) attributes {dimension_semantics = [#tpu.dimension_semantics<arbitrary>], iteration_bounds = array<i64: 1>, scalar_prefetch = 0 : i64, scratch_operands = 0 : i64, tpu.core_type = #tpu.core_type<tc>, window_params = [{pipeline_mode = #tpu.pipeline_mode<synchronous>, transform_indices = @transform_0, window_bounds = array<i64: 16, 16>}, {pipeline_mode = #tpu.pipeline_mode<synchronous>, transform_indices = @transform_1, window_bounds = array<i64: 16, 128>}, {pipeline_mode = #tpu.pipeline_mode<synchronous>, transform_indices = @transform_2, window_bounds = array<i64: 32, 128>}, {pipeline_mode = #tpu.pipeline_mode<synchronous>, transform_indices = @transform_3, window_bounds = array<i64: 1, 128>}, {pipeline_mode = #tpu.pipeline_mode<synchronous>, transform_indices = @transform_4, window_bounds = array<i64: 32, 128>}, {pipeline_mode = #tpu.pipeline_mode<synchronous>, transform_indices = @transform_5, window_bounds = array<i64: 32, 128>}, {pipeline_mode = #tpu.pipeline_mode<synchronous>, transform_indices = @transform_6, window_bounds = array<i64: 1, 128>}, {pipeline_mode = #tpu.pipeline_mode<synchronous>, transform_indices = @transform_7, window_bounds = array<i64: 32, 128>}, {pipeline_mode = #tpu.pipeline_mode<synchronous>, transform_indices = @transform_8, window_bounds = array<i64: 1, 128>}, {pipeline_mode = #tpu.pipeline_mode<synchronous>, transform_indices = @transform_9, window_bounds = array<i64: 2, 128>}]} {
    %c0 = arith.constant 0 : index
    %c0_0 = arith.constant 0 : index
    %0 = vector.load %arg3[%c0, %c0_0] : memref<32x128xf32, #tpu.memory_space<vmem>>, vector<32x128xf32>
    %c0_1 = arith.constant 0 : index
    %c0_2 = arith.constant 0 : index
    %1 = vector.load %arg6[%c0_1, %c0_2] : memref<32x128xf32, #tpu.memory_space<vmem>>, vector<32x128xf32>
    %c0_3 = arith.constant 0 : index
    %c0_4 = arith.constant 0 : index
    %2 = vector.load %arg5[%c0_3, %c0_4] : memref<32x128xf32, #tpu.memory_space<vmem>>, vector<32x128xf32>
    %c0_5 = arith.constant 0 : index
    %c0_6 = arith.constant 0 : index
    %3 = vector.load %arg7[%c0_5, %c0_6] : memref<1x128xf32, #tpu.memory_space<vmem>>, vector<1x128xf32>
    %c0_7 = arith.constant 0 : index
    %c0_8 = arith.constant 0 : index
    %4 = vector.load %arg1[%c0_7, %c0_8] : memref<16x16xf32, #tpu.memory_space<vmem>>, vector<16x16xf32>
    %c0_9 = arith.constant 0 : index
    %c0_10 = arith.constant 0 : index
    %5 = vector.load %arg2[%c0_9, %c0_10] : memref<16x128xf32, #tpu.memory_space<vmem>>, vector<16x128xf32>
    %cst = arith.constant dense<0.000000e+00> : vector<16x128xf32>
    %6 = tpu.matmul %4, %5, %cst {dimension_numbers = #tpu.dot_dimension_numbers<[1], [0], [0], [1], [0, 0, 1, 1], [], []>} : vector<16x16xf32>, vector<16x128xf32>, vector<16x128xf32> -> vector<16x128xf32>
    %c0_11 = arith.constant 0 : index
    %c0_12 = arith.constant 0 : index
    %7 = vector.load %arg4[%c0_11, %c0_12] : memref<1x128xf32, #tpu.memory_space<vmem>>, vector<1x128xf32>
    %8 = vector.broadcast %7 : vector<1x128xf32> to vector<16x128xf32>
    %9 = arith.addf %6, %8 : vector<16x128xf32>
    %cst_13 = arith.constant 0.000000e+00 : f32
    %10 = vector.broadcast %cst_13 : f32 to vector<2x32xf32>
    %11 = vector.extract_strided_slice %9 {offsets = [0, 0], sizes = [2, 128], strides = [1, 1]} : vector<16x128xf32> to vector<2x128xf32>
    %cst_14 = arith.constant dense<0.000000e+00> : vector<2x128xf32>
    %12 = tpu.matmul %10, %0, %cst_14 {dimension_numbers = #tpu.dot_dimension_numbers<[1], [0], [0], [1], [0, 0, 1, 1], [], []>} : vector<2x32xf32>, vector<32x128xf32>, vector<2x128xf32> -> vector<2x128xf32>
    %13 = arith.addf %11, %12 : vector<2x128xf32>
    %cst_15 = arith.constant 5.000000e-01 : f32
    %14 = vector.broadcast %cst_15 : f32 to vector<2x128xf32>
    %15 = arith.mulf %14, %13 : vector<2x128xf32>
    %16 = math.tanh %15 : vector<2x128xf32>
    %cst_16 = arith.constant 1.000000e+00 : f32
    %17 = vector.broadcast %cst_16 : f32 to vector<2x128xf32>
    %18 = arith.addf %16, %17 : vector<2x128xf32>
    %cst_17 = arith.constant 5.000000e-01 : f32
    %19 = vector.broadcast %cst_17 : f32 to vector<2x128xf32>
    %20 = arith.mulf %19, %18 : vector<2x128xf32>
    %21 = vector.extract_strided_slice %20 {offsets = [0, 0], sizes = [2, 32], strides = [1, 1]} : vector<2x128xf32> to vector<2x32xf32>
    %22 = vector.extract_strided_slice %20 {offsets = [0, 32], sizes = [2, 32], strides = [1, 1]} : vector<2x128xf32> to vector<2x32xf32>
    %23 = vector.extract_strided_slice %20 {offsets = [0, 96], sizes = [2, 32], strides = [1, 1]} : vector<2x128xf32> to vector<2x32xf32>
    %24 = vector.extract_strided_slice %13 {offsets = [0, 64], sizes = [2, 32], strides = [1, 1]} : vector<2x128xf32> to vector<2x32xf32>
    %25 = math.tanh %24 : vector<2x32xf32>
    %26 = arith.mulf %22, %10 : vector<2x32xf32>
    %27 = arith.mulf %21, %25 : vector<2x32xf32>
    %28 = arith.addf %26, %27 : vector<2x32xf32>
    %29 = math.tanh %28 : vector<2x32xf32>
    %30 = arith.mulf %23, %29 : vector<2x32xf32>
    %cst_18 = arith.constant dense<0.000000e+00> : vector<2x128xf32>
    %31 = tpu.matmul %30, %2, %cst_18 {dimension_numbers = #tpu.dot_dimension_numbers<[1], [0], [0], [1], [0, 0, 1, 1], [], []>} : vector<2x32xf32>, vector<32x128xf32>, vector<2x128xf32> -> vector<2x128xf32>
    %32 = vector.broadcast %3 : vector<1x128xf32> to vector<2x128xf32>
    %33 = arith.addf %31, %32 : vector<2x128xf32>
    %34 = vector.extract_strided_slice %9 {offsets = [2, 0], sizes = [2, 128], strides = [1, 1]} : vector<16x128xf32> to vector<2x128xf32>
    %cst_19 = arith.constant dense<0.000000e+00> : vector<2x128xf32>
    %35 = tpu.matmul %30, %0, %cst_19 {dimension_numbers = #tpu.dot_dimension_numbers<[1], [0], [0], [1], [0, 0, 1, 1], [], []>} : vector<2x32xf32>, vector<32x128xf32>, vector<2x128xf32> -> vector<2x128xf32>
    %36 = arith.addf %34, %35 : vector<2x128xf32>
    %cst_20 = arith.constant 5.000000e-01 : f32
    %37 = vector.broadcast %cst_20 : f32 to vector<2x128xf32>
    %38 = arith.mulf %37, %36 : vector<2x128xf32>
    %39 = math.tanh %38 : vector<2x128xf32>
    %cst_21 = arith.constant 1.000000e+00 : f32
    %40 = vector.broadcast %cst_21 : f32 to vector<2x128xf32>
    %41 = arith.addf %39, %40 : vector<2x128xf32>
    %cst_22 = arith.constant 5.000000e-01 : f32
    %42 = vector.broadcast %cst_22 : f32 to vector<2x128xf32>
    %43 = arith.mulf %42, %41 : vector<2x128xf32>
    %44 = vector.extract_strided_slice %43 {offsets = [0, 0], sizes = [2, 32], strides = [1, 1]} : vector<2x128xf32> to vector<2x32xf32>
    %45 = vector.extract_strided_slice %43 {offsets = [0, 32], sizes = [2, 32], strides = [1, 1]} : vector<2x128xf32> to vector<2x32xf32>
    %46 = vector.extract_strided_slice %43 {offsets = [0, 96], sizes = [2, 32], strides = [1, 1]} : vector<2x128xf32> to vector<2x32xf32>
    %47 = vector.extract_strided_slice %36 {offsets = [0, 64], sizes = [2, 32], strides = [1, 1]} : vector<2x128xf32> to vector<2x32xf32>
    %48 = math.tanh %47 : vector<2x32xf32>
    %49 = arith.mulf %45, %28 : vector<2x32xf32>
    %50 = arith.mulf %44, %48 : vector<2x32xf32>
    %51 = arith.addf %49, %50 : vector<2x32xf32>
    %52 = math.tanh %51 : vector<2x32xf32>
    %53 = arith.mulf %46, %52 : vector<2x32xf32>
    %cst_23 = arith.constant dense<0.000000e+00> : vector<2x128xf32>
    %54 = tpu.matmul %10, %1, %cst_23 {dimension_numbers = #tpu.dot_dimension_numbers<[1], [0], [0], [1], [0, 0, 1, 1], [], []>} : vector<2x32xf32>, vector<32x128xf32>, vector<2x128xf32> -> vector<2x128xf32>
    %55 = arith.addf %33, %54 : vector<2x128xf32>
    %cst_24 = arith.constant 5.000000e-01 : f32
    %56 = vector.broadcast %cst_24 : f32 to vector<2x128xf32>
    %57 = arith.mulf %56, %55 : vector<2x128xf32>
    %58 = math.tanh %57 : vector<2x128xf32>
    %cst_25 = arith.constant 1.000000e+00 : f32
    %59 = vector.broadcast %cst_25 : f32 to vector<2x128xf32>
    %60 = arith.addf %58, %59 : vector<2x128xf32>
    %cst_26 = arith.constant 5.000000e-01 : f32
    %61 = vector.broadcast %cst_26 : f32 to vector<2x128xf32>
    %62 = arith.mulf %61, %60 : vector<2x128xf32>
    %63 = vector.extract_strided_slice %62 {offsets = [0, 0], sizes = [2, 32], strides = [1, 1]} : vector<2x128xf32> to vector<2x32xf32>
    %64 = vector.extract_strided_slice %62 {offsets = [0, 32], sizes = [2, 32], strides = [1, 1]} : vector<2x128xf32> to vector<2x32xf32>
    %65 = vector.extract_strided_slice %62 {offsets = [0, 96], sizes = [2, 32], strides = [1, 1]} : vector<2x128xf32> to vector<2x32xf32>
    %66 = vector.extract_strided_slice %55 {offsets = [0, 64], sizes = [2, 32], strides = [1, 1]} : vector<2x128xf32> to vector<2x32xf32>
    %67 = math.tanh %66 : vector<2x32xf32>
    %68 = arith.mulf %64, %10 : vector<2x32xf32>
    %69 = arith.mulf %63, %67 : vector<2x32xf32>
    %70 = arith.addf %68, %69 : vector<2x32xf32>
    %71 = math.tanh %70 : vector<2x32xf32>
    %72 = arith.mulf %65, %71 : vector<2x32xf32>
    %cst_27 = arith.constant dense<0.000000e+00> : vector<2x128xf32>
    %73 = tpu.matmul %53, %2, %cst_27 {dimension_numbers = #tpu.dot_dimension_numbers<[1], [0], [0], [1], [0, 0, 1, 1], [], []>} : vector<2x32xf32>, vector<32x128xf32>, vector<2x128xf32> -> vector<2x128xf32>
    %74 = vector.broadcast %3 : vector<1x128xf32> to vector<2x128xf32>
    %75 = arith.addf %73, %74 : vector<2x128xf32>
    %76 = vector.extract_strided_slice %9 {offsets = [4, 0], sizes = [2, 128], strides = [1, 1]} : vector<16x128xf32> to vector<2x128xf32>
    %cst_28 = arith.constant dense<0.000000e+00> : vector<2x128xf32>
    %77 = tpu.matmul %53, %0, %cst_28 {dimension_numbers = #tpu.dot_dimension_numbers<[1], [0], [0], [1], [0, 0, 1, 1], [], []>} : vector<2x32xf32>, vector<32x128xf32>, vector<2x128xf32> -> vector<2x128xf32>
    %78 = arith.addf %76, %77 : vector<2x128xf32>
    %cst_29 = arith.constant 5.000000e-01 : f32
    %79 = vector.broadcast %cst_29 : f32 to vector<2x128xf32>
    %80 = arith.mulf %79, %78 : vector<2x128xf32>
    %81 = math.tanh %80 : vector<2x128xf32>
    %cst_30 = arith.constant 1.000000e+00 : f32
    %82 = vector.broadcast %cst_30 : f32 to vector<2x128xf32>
    %83 = arith.addf %81, %82 : vector<2x128xf32>
    %cst_31 = arith.constant 5.000000e-01 : f32
    %84 = vector.broadcast %cst_31 : f32 to vector<2x128xf32>
    %85 = arith.mulf %84, %83 : vector<2x128xf32>
    %86 = vector.extract_strided_slice %85 {offsets = [0, 0], sizes = [2, 32], strides = [1, 1]} : vector<2x128xf32> to vector<2x32xf32>
    %87 = vector.extract_strided_slice %85 {offsets = [0, 32], sizes = [2, 32], strides = [1, 1]} : vector<2x128xf32> to vector<2x32xf32>
    %88 = vector.extract_strided_slice %85 {offsets = [0, 96], sizes = [2, 32], strides = [1, 1]} : vector<2x128xf32> to vector<2x32xf32>
    %89 = vector.extract_strided_slice %78 {offsets = [0, 64], sizes = [2, 32], strides = [1, 1]} : vector<2x128xf32> to vector<2x32xf32>
    %90 = math.tanh %89 : vector<2x32xf32>
    %91 = arith.mulf %87, %51 : vector<2x32xf32>
    %92 = arith.mulf %86, %90 : vector<2x32xf32>
    %93 = arith.addf %91, %92 : vector<2x32xf32>
    %94 = math.tanh %93 : vector<2x32xf32>
    %95 = arith.mulf %88, %94 : vector<2x32xf32>
    %cst_32 = arith.constant dense<0.000000e+00> : vector<2x128xf32>
    %96 = tpu.matmul %72, %1, %cst_32 {dimension_numbers = #tpu.dot_dimension_numbers<[1], [0], [0], [1], [0, 0, 1, 1], [], []>} : vector<2x32xf32>, vector<32x128xf32>, vector<2x128xf32> -> vector<2x128xf32>
    %97 = arith.addf %75, %96 : vector<2x128xf32>
    %cst_33 = arith.constant 5.000000e-01 : f32
    %98 = vector.broadcast %cst_33 : f32 to vector<2x128xf32>
    %99 = arith.mulf %98, %97 : vector<2x128xf32>
    %100 = math.tanh %99 : vector<2x128xf32>
    %cst_34 = arith.constant 1.000000e+00 : f32
    %101 = vector.broadcast %cst_34 : f32 to vector<2x128xf32>
    %102 = arith.addf %100, %101 : vector<2x128xf32>
    %cst_35 = arith.constant 5.000000e-01 : f32
    %103 = vector.broadcast %cst_35 : f32 to vector<2x128xf32>
    %104 = arith.mulf %103, %102 : vector<2x128xf32>
    %105 = vector.extract_strided_slice %104 {offsets = [0, 0], sizes = [2, 32], strides = [1, 1]} : vector<2x128xf32> to vector<2x32xf32>
    %106 = vector.extract_strided_slice %104 {offsets = [0, 32], sizes = [2, 32], strides = [1, 1]} : vector<2x128xf32> to vector<2x32xf32>
    %107 = vector.extract_strided_slice %104 {offsets = [0, 96], sizes = [2, 32], strides = [1, 1]} : vector<2x128xf32> to vector<2x32xf32>
    %108 = vector.extract_strided_slice %97 {offsets = [0, 64], sizes = [2, 32], strides = [1, 1]} : vector<2x128xf32> to vector<2x32xf32>
    %109 = math.tanh %108 : vector<2x32xf32>
    %110 = arith.mulf %106, %70 : vector<2x32xf32>
    %111 = arith.mulf %105, %109 : vector<2x32xf32>
    %112 = arith.addf %110, %111 : vector<2x32xf32>
    %113 = math.tanh %112 : vector<2x32xf32>
    %114 = arith.mulf %107, %113 : vector<2x32xf32>
    %cst_36 = arith.constant dense<0.000000e+00> : vector<2x128xf32>
    %115 = tpu.matmul %95, %2, %cst_36 {dimension_numbers = #tpu.dot_dimension_numbers<[1], [0], [0], [1], [0, 0, 1, 1], [], []>} : vector<2x32xf32>, vector<32x128xf32>, vector<2x128xf32> -> vector<2x128xf32>
    %116 = vector.broadcast %3 : vector<1x128xf32> to vector<2x128xf32>
    %117 = arith.addf %115, %116 : vector<2x128xf32>
    %118 = vector.extract_strided_slice %9 {offsets = [6, 0], sizes = [2, 128], strides = [1, 1]} : vector<16x128xf32> to vector<2x128xf32>
    %cst_37 = arith.constant dense<0.000000e+00> : vector<2x128xf32>
    %119 = tpu.matmul %95, %0, %cst_37 {dimension_numbers = #tpu.dot_dimension_numbers<[1], [0], [0], [1], [0, 0, 1, 1], [], []>} : vector<2x32xf32>, vector<32x128xf32>, vector<2x128xf32> -> vector<2x128xf32>
    %120 = arith.addf %118, %119 : vector<2x128xf32>
    %cst_38 = arith.constant 5.000000e-01 : f32
    %121 = vector.broadcast %cst_38 : f32 to vector<2x128xf32>
    %122 = arith.mulf %121, %120 : vector<2x128xf32>
    %123 = math.tanh %122 : vector<2x128xf32>
    %cst_39 = arith.constant 1.000000e+00 : f32
    %124 = vector.broadcast %cst_39 : f32 to vector<2x128xf32>
    %125 = arith.addf %123, %124 : vector<2x128xf32>
    %cst_40 = arith.constant 5.000000e-01 : f32
    %126 = vector.broadcast %cst_40 : f32 to vector<2x128xf32>
    %127 = arith.mulf %126, %125 : vector<2x128xf32>
    %128 = vector.extract_strided_slice %127 {offsets = [0, 0], sizes = [2, 32], strides = [1, 1]} : vector<2x128xf32> to vector<2x32xf32>
    %129 = vector.extract_strided_slice %127 {offsets = [0, 32], sizes = [2, 32], strides = [1, 1]} : vector<2x128xf32> to vector<2x32xf32>
    %130 = vector.extract_strided_slice %127 {offsets = [0, 96], sizes = [2, 32], strides = [1, 1]} : vector<2x128xf32> to vector<2x32xf32>
    %131 = vector.extract_strided_slice %120 {offsets = [0, 64], sizes = [2, 32], strides = [1, 1]} : vector<2x128xf32> to vector<2x32xf32>
    %132 = math.tanh %131 : vector<2x32xf32>
    %133 = arith.mulf %129, %93 : vector<2x32xf32>
    %134 = arith.mulf %128, %132 : vector<2x32xf32>
    %135 = arith.addf %133, %134 : vector<2x32xf32>
    %136 = math.tanh %135 : vector<2x32xf32>
    %137 = arith.mulf %130, %136 : vector<2x32xf32>
    %cst_41 = arith.constant dense<0.000000e+00> : vector<2x128xf32>
    %138 = tpu.matmul %114, %1, %cst_41 {dimension_numbers = #tpu.dot_dimension_numbers<[1], [0], [0], [1], [0, 0, 1, 1], [], []>} : vector<2x32xf32>, vector<32x128xf32>, vector<2x128xf32> -> vector<2x128xf32>
    %139 = arith.addf %117, %138 : vector<2x128xf32>
    %cst_42 = arith.constant 5.000000e-01 : f32
    %140 = vector.broadcast %cst_42 : f32 to vector<2x128xf32>
    %141 = arith.mulf %140, %139 : vector<2x128xf32>
    %142 = math.tanh %141 : vector<2x128xf32>
    %cst_43 = arith.constant 1.000000e+00 : f32
    %143 = vector.broadcast %cst_43 : f32 to vector<2x128xf32>
    %144 = arith.addf %142, %143 : vector<2x128xf32>
    %cst_44 = arith.constant 5.000000e-01 : f32
    %145 = vector.broadcast %cst_44 : f32 to vector<2x128xf32>
    %146 = arith.mulf %145, %144 : vector<2x128xf32>
    %147 = vector.extract_strided_slice %146 {offsets = [0, 0], sizes = [2, 32], strides = [1, 1]} : vector<2x128xf32> to vector<2x32xf32>
    %148 = vector.extract_strided_slice %146 {offsets = [0, 32], sizes = [2, 32], strides = [1, 1]} : vector<2x128xf32> to vector<2x32xf32>
    %149 = vector.extract_strided_slice %146 {offsets = [0, 96], sizes = [2, 32], strides = [1, 1]} : vector<2x128xf32> to vector<2x32xf32>
    %150 = vector.extract_strided_slice %139 {offsets = [0, 64], sizes = [2, 32], strides = [1, 1]} : vector<2x128xf32> to vector<2x32xf32>
    %151 = math.tanh %150 : vector<2x32xf32>
    %152 = arith.mulf %148, %112 : vector<2x32xf32>
    %153 = arith.mulf %147, %151 : vector<2x32xf32>
    %154 = arith.addf %152, %153 : vector<2x32xf32>
    %155 = math.tanh %154 : vector<2x32xf32>
    %156 = arith.mulf %149, %155 : vector<2x32xf32>
    %cst_45 = arith.constant dense<0.000000e+00> : vector<2x128xf32>
    %157 = tpu.matmul %137, %2, %cst_45 {dimension_numbers = #tpu.dot_dimension_numbers<[1], [0], [0], [1], [0, 0, 1, 1], [], []>} : vector<2x32xf32>, vector<32x128xf32>, vector<2x128xf32> -> vector<2x128xf32>
    %158 = vector.broadcast %3 : vector<1x128xf32> to vector<2x128xf32>
    %159 = arith.addf %157, %158 : vector<2x128xf32>
    %160 = vector.extract_strided_slice %9 {offsets = [8, 0], sizes = [2, 128], strides = [1, 1]} : vector<16x128xf32> to vector<2x128xf32>
    %cst_46 = arith.constant dense<0.000000e+00> : vector<2x128xf32>
    %161 = tpu.matmul %137, %0, %cst_46 {dimension_numbers = #tpu.dot_dimension_numbers<[1], [0], [0], [1], [0, 0, 1, 1], [], []>} : vector<2x32xf32>, vector<32x128xf32>, vector<2x128xf32> -> vector<2x128xf32>
    %162 = arith.addf %160, %161 : vector<2x128xf32>
    %cst_47 = arith.constant 5.000000e-01 : f32
    %163 = vector.broadcast %cst_47 : f32 to vector<2x128xf32>
    %164 = arith.mulf %163, %162 : vector<2x128xf32>
    %165 = math.tanh %164 : vector<2x128xf32>
    %cst_48 = arith.constant 1.000000e+00 : f32
    %166 = vector.broadcast %cst_48 : f32 to vector<2x128xf32>
    %167 = arith.addf %165, %166 : vector<2x128xf32>
    %cst_49 = arith.constant 5.000000e-01 : f32
    %168 = vector.broadcast %cst_49 : f32 to vector<2x128xf32>
    %169 = arith.mulf %168, %167 : vector<2x128xf32>
    %170 = vector.extract_strided_slice %169 {offsets = [0, 0], sizes = [2, 32], strides = [1, 1]} : vector<2x128xf32> to vector<2x32xf32>
    %171 = vector.extract_strided_slice %169 {offsets = [0, 32], sizes = [2, 32], strides = [1, 1]} : vector<2x128xf32> to vector<2x32xf32>
    %172 = vector.extract_strided_slice %169 {offsets = [0, 96], sizes = [2, 32], strides = [1, 1]} : vector<2x128xf32> to vector<2x32xf32>
    %173 = vector.extract_strided_slice %162 {offsets = [0, 64], sizes = [2, 32], strides = [1, 1]} : vector<2x128xf32> to vector<2x32xf32>
    %174 = math.tanh %173 : vector<2x32xf32>
    %175 = arith.mulf %171, %135 : vector<2x32xf32>
    %176 = arith.mulf %170, %174 : vector<2x32xf32>
    %177 = arith.addf %175, %176 : vector<2x32xf32>
    %178 = math.tanh %177 : vector<2x32xf32>
    %179 = arith.mulf %172, %178 : vector<2x32xf32>
    %cst_50 = arith.constant dense<0.000000e+00> : vector<2x128xf32>
    %180 = tpu.matmul %156, %1, %cst_50 {dimension_numbers = #tpu.dot_dimension_numbers<[1], [0], [0], [1], [0, 0, 1, 1], [], []>} : vector<2x32xf32>, vector<32x128xf32>, vector<2x128xf32> -> vector<2x128xf32>
    %181 = arith.addf %159, %180 : vector<2x128xf32>
    %cst_51 = arith.constant 5.000000e-01 : f32
    %182 = vector.broadcast %cst_51 : f32 to vector<2x128xf32>
    %183 = arith.mulf %182, %181 : vector<2x128xf32>
    %184 = math.tanh %183 : vector<2x128xf32>
    %cst_52 = arith.constant 1.000000e+00 : f32
    %185 = vector.broadcast %cst_52 : f32 to vector<2x128xf32>
    %186 = arith.addf %184, %185 : vector<2x128xf32>
    %cst_53 = arith.constant 5.000000e-01 : f32
    %187 = vector.broadcast %cst_53 : f32 to vector<2x128xf32>
    %188 = arith.mulf %187, %186 : vector<2x128xf32>
    %189 = vector.extract_strided_slice %188 {offsets = [0, 0], sizes = [2, 32], strides = [1, 1]} : vector<2x128xf32> to vector<2x32xf32>
    %190 = vector.extract_strided_slice %188 {offsets = [0, 32], sizes = [2, 32], strides = [1, 1]} : vector<2x128xf32> to vector<2x32xf32>
    %191 = vector.extract_strided_slice %188 {offsets = [0, 96], sizes = [2, 32], strides = [1, 1]} : vector<2x128xf32> to vector<2x32xf32>
    %192 = vector.extract_strided_slice %181 {offsets = [0, 64], sizes = [2, 32], strides = [1, 1]} : vector<2x128xf32> to vector<2x32xf32>
    %193 = math.tanh %192 : vector<2x32xf32>
    %194 = arith.mulf %190, %154 : vector<2x32xf32>
    %195 = arith.mulf %189, %193 : vector<2x32xf32>
    %196 = arith.addf %194, %195 : vector<2x32xf32>
    %197 = math.tanh %196 : vector<2x32xf32>
    %198 = arith.mulf %191, %197 : vector<2x32xf32>
    %cst_54 = arith.constant dense<0.000000e+00> : vector<2x128xf32>
    %199 = tpu.matmul %179, %2, %cst_54 {dimension_numbers = #tpu.dot_dimension_numbers<[1], [0], [0], [1], [0, 0, 1, 1], [], []>} : vector<2x32xf32>, vector<32x128xf32>, vector<2x128xf32> -> vector<2x128xf32>
    %200 = vector.broadcast %3 : vector<1x128xf32> to vector<2x128xf32>
    %201 = arith.addf %199, %200 : vector<2x128xf32>
    %202 = vector.extract_strided_slice %9 {offsets = [10, 0], sizes = [2, 128], strides = [1, 1]} : vector<16x128xf32> to vector<2x128xf32>
    %cst_55 = arith.constant dense<0.000000e+00> : vector<2x128xf32>
    %203 = tpu.matmul %179, %0, %cst_55 {dimension_numbers = #tpu.dot_dimension_numbers<[1], [0], [0], [1], [0, 0, 1, 1], [], []>} : vector<2x32xf32>, vector<32x128xf32>, vector<2x128xf32> -> vector<2x128xf32>
    %204 = arith.addf %202, %203 : vector<2x128xf32>
    %cst_56 = arith.constant 5.000000e-01 : f32
    %205 = vector.broadcast %cst_56 : f32 to vector<2x128xf32>
    %206 = arith.mulf %205, %204 : vector<2x128xf32>
    %207 = math.tanh %206 : vector<2x128xf32>
    %cst_57 = arith.constant 1.000000e+00 : f32
    %208 = vector.broadcast %cst_57 : f32 to vector<2x128xf32>
    %209 = arith.addf %207, %208 : vector<2x128xf32>
    %cst_58 = arith.constant 5.000000e-01 : f32
    %210 = vector.broadcast %cst_58 : f32 to vector<2x128xf32>
    %211 = arith.mulf %210, %209 : vector<2x128xf32>
    %212 = vector.extract_strided_slice %211 {offsets = [0, 0], sizes = [2, 32], strides = [1, 1]} : vector<2x128xf32> to vector<2x32xf32>
    %213 = vector.extract_strided_slice %211 {offsets = [0, 32], sizes = [2, 32], strides = [1, 1]} : vector<2x128xf32> to vector<2x32xf32>
    %214 = vector.extract_strided_slice %211 {offsets = [0, 96], sizes = [2, 32], strides = [1, 1]} : vector<2x128xf32> to vector<2x32xf32>
    %215 = vector.extract_strided_slice %204 {offsets = [0, 64], sizes = [2, 32], strides = [1, 1]} : vector<2x128xf32> to vector<2x32xf32>
    %216 = math.tanh %215 : vector<2x32xf32>
    %217 = arith.mulf %213, %177 : vector<2x32xf32>
    %218 = arith.mulf %212, %216 : vector<2x32xf32>
    %219 = arith.addf %217, %218 : vector<2x32xf32>
    %220 = math.tanh %219 : vector<2x32xf32>
    %221 = arith.mulf %214, %220 : vector<2x32xf32>
    %cst_59 = arith.constant dense<0.000000e+00> : vector<2x128xf32>
    %222 = tpu.matmul %198, %1, %cst_59 {dimension_numbers = #tpu.dot_dimension_numbers<[1], [0], [0], [1], [0, 0, 1, 1], [], []>} : vector<2x32xf32>, vector<32x128xf32>, vector<2x128xf32> -> vector<2x128xf32>
    %223 = arith.addf %201, %222 : vector<2x128xf32>
    %cst_60 = arith.constant 5.000000e-01 : f32
    %224 = vector.broadcast %cst_60 : f32 to vector<2x128xf32>
    %225 = arith.mulf %224, %223 : vector<2x128xf32>
    %226 = math.tanh %225 : vector<2x128xf32>
    %cst_61 = arith.constant 1.000000e+00 : f32
    %227 = vector.broadcast %cst_61 : f32 to vector<2x128xf32>
    %228 = arith.addf %226, %227 : vector<2x128xf32>
    %cst_62 = arith.constant 5.000000e-01 : f32
    %229 = vector.broadcast %cst_62 : f32 to vector<2x128xf32>
    %230 = arith.mulf %229, %228 : vector<2x128xf32>
    %231 = vector.extract_strided_slice %230 {offsets = [0, 0], sizes = [2, 32], strides = [1, 1]} : vector<2x128xf32> to vector<2x32xf32>
    %232 = vector.extract_strided_slice %230 {offsets = [0, 32], sizes = [2, 32], strides = [1, 1]} : vector<2x128xf32> to vector<2x32xf32>
    %233 = vector.extract_strided_slice %230 {offsets = [0, 96], sizes = [2, 32], strides = [1, 1]} : vector<2x128xf32> to vector<2x32xf32>
    %234 = vector.extract_strided_slice %223 {offsets = [0, 64], sizes = [2, 32], strides = [1, 1]} : vector<2x128xf32> to vector<2x32xf32>
    %235 = math.tanh %234 : vector<2x32xf32>
    %236 = arith.mulf %232, %196 : vector<2x32xf32>
    %237 = arith.mulf %231, %235 : vector<2x32xf32>
    %238 = arith.addf %236, %237 : vector<2x32xf32>
    %239 = math.tanh %238 : vector<2x32xf32>
    %240 = arith.mulf %233, %239 : vector<2x32xf32>
    %cst_63 = arith.constant dense<0.000000e+00> : vector<2x128xf32>
    %241 = tpu.matmul %221, %2, %cst_63 {dimension_numbers = #tpu.dot_dimension_numbers<[1], [0], [0], [1], [0, 0, 1, 1], [], []>} : vector<2x32xf32>, vector<32x128xf32>, vector<2x128xf32> -> vector<2x128xf32>
    %242 = vector.broadcast %3 : vector<1x128xf32> to vector<2x128xf32>
    %243 = arith.addf %241, %242 : vector<2x128xf32>
    %244 = vector.extract_strided_slice %9 {offsets = [12, 0], sizes = [2, 128], strides = [1, 1]} : vector<16x128xf32> to vector<2x128xf32>
    %cst_64 = arith.constant dense<0.000000e+00> : vector<2x128xf32>
    %245 = tpu.matmul %221, %0, %cst_64 {dimension_numbers = #tpu.dot_dimension_numbers<[1], [0], [0], [1], [0, 0, 1, 1], [], []>} : vector<2x32xf32>, vector<32x128xf32>, vector<2x128xf32> -> vector<2x128xf32>
    %246 = arith.addf %244, %245 : vector<2x128xf32>
    %cst_65 = arith.constant 5.000000e-01 : f32
    %247 = vector.broadcast %cst_65 : f32 to vector<2x128xf32>
    %248 = arith.mulf %247, %246 : vector<2x128xf32>
    %249 = math.tanh %248 : vector<2x128xf32>
    %cst_66 = arith.constant 1.000000e+00 : f32
    %250 = vector.broadcast %cst_66 : f32 to vector<2x128xf32>
    %251 = arith.addf %249, %250 : vector<2x128xf32>
    %cst_67 = arith.constant 5.000000e-01 : f32
    %252 = vector.broadcast %cst_67 : f32 to vector<2x128xf32>
    %253 = arith.mulf %252, %251 : vector<2x128xf32>
    %254 = vector.extract_strided_slice %253 {offsets = [0, 0], sizes = [2, 32], strides = [1, 1]} : vector<2x128xf32> to vector<2x32xf32>
    %255 = vector.extract_strided_slice %253 {offsets = [0, 32], sizes = [2, 32], strides = [1, 1]} : vector<2x128xf32> to vector<2x32xf32>
    %256 = vector.extract_strided_slice %253 {offsets = [0, 96], sizes = [2, 32], strides = [1, 1]} : vector<2x128xf32> to vector<2x32xf32>
    %257 = vector.extract_strided_slice %246 {offsets = [0, 64], sizes = [2, 32], strides = [1, 1]} : vector<2x128xf32> to vector<2x32xf32>
    %258 = math.tanh %257 : vector<2x32xf32>
    %259 = arith.mulf %255, %219 : vector<2x32xf32>
    %260 = arith.mulf %254, %258 : vector<2x32xf32>
    %261 = arith.addf %259, %260 : vector<2x32xf32>
    %262 = math.tanh %261 : vector<2x32xf32>
    %263 = arith.mulf %256, %262 : vector<2x32xf32>
    %cst_68 = arith.constant dense<0.000000e+00> : vector<2x128xf32>
    %264 = tpu.matmul %240, %1, %cst_68 {dimension_numbers = #tpu.dot_dimension_numbers<[1], [0], [0], [1], [0, 0, 1, 1], [], []>} : vector<2x32xf32>, vector<32x128xf32>, vector<2x128xf32> -> vector<2x128xf32>
    %265 = arith.addf %243, %264 : vector<2x128xf32>
    %cst_69 = arith.constant 5.000000e-01 : f32
    %266 = vector.broadcast %cst_69 : f32 to vector<2x128xf32>
    %267 = arith.mulf %266, %265 : vector<2x128xf32>
    %268 = math.tanh %267 : vector<2x128xf32>
    %cst_70 = arith.constant 1.000000e+00 : f32
    %269 = vector.broadcast %cst_70 : f32 to vector<2x128xf32>
    %270 = arith.addf %268, %269 : vector<2x128xf32>
    %cst_71 = arith.constant 5.000000e-01 : f32
    %271 = vector.broadcast %cst_71 : f32 to vector<2x128xf32>
    %272 = arith.mulf %271, %270 : vector<2x128xf32>
    %273 = vector.extract_strided_slice %272 {offsets = [0, 0], sizes = [2, 32], strides = [1, 1]} : vector<2x128xf32> to vector<2x32xf32>
    %274 = vector.extract_strided_slice %272 {offsets = [0, 32], sizes = [2, 32], strides = [1, 1]} : vector<2x128xf32> to vector<2x32xf32>
    %275 = vector.extract_strided_slice %272 {offsets = [0, 96], sizes = [2, 32], strides = [1, 1]} : vector<2x128xf32> to vector<2x32xf32>
    %276 = vector.extract_strided_slice %265 {offsets = [0, 64], sizes = [2, 32], strides = [1, 1]} : vector<2x128xf32> to vector<2x32xf32>
    %277 = math.tanh %276 : vector<2x32xf32>
    %278 = arith.mulf %274, %238 : vector<2x32xf32>
    %279 = arith.mulf %273, %277 : vector<2x32xf32>
    %280 = arith.addf %278, %279 : vector<2x32xf32>
    %281 = math.tanh %280 : vector<2x32xf32>
    %282 = arith.mulf %275, %281 : vector<2x32xf32>
    %cst_72 = arith.constant dense<0.000000e+00> : vector<2x128xf32>
    %283 = tpu.matmul %263, %2, %cst_72 {dimension_numbers = #tpu.dot_dimension_numbers<[1], [0], [0], [1], [0, 0, 1, 1], [], []>} : vector<2x32xf32>, vector<32x128xf32>, vector<2x128xf32> -> vector<2x128xf32>
    %284 = vector.broadcast %3 : vector<1x128xf32> to vector<2x128xf32>
    %285 = arith.addf %283, %284 : vector<2x128xf32>
    %286 = vector.extract_strided_slice %9 {offsets = [14, 0], sizes = [2, 128], strides = [1, 1]} : vector<16x128xf32> to vector<2x128xf32>
    %cst_73 = arith.constant dense<0.000000e+00> : vector<2x128xf32>
    %287 = tpu.matmul %263, %0, %cst_73 {dimension_numbers = #tpu.dot_dimension_numbers<[1], [0], [0], [1], [0, 0, 1, 1], [], []>} : vector<2x32xf32>, vector<32x128xf32>, vector<2x128xf32> -> vector<2x128xf32>
    %288 = arith.addf %286, %287 : vector<2x128xf32>
    %cst_74 = arith.constant 5.000000e-01 : f32
    %289 = vector.broadcast %cst_74 : f32 to vector<2x128xf32>
    %290 = arith.mulf %289, %288 : vector<2x128xf32>
    %291 = math.tanh %290 : vector<2x128xf32>
    %cst_75 = arith.constant 1.000000e+00 : f32
    %292 = vector.broadcast %cst_75 : f32 to vector<2x128xf32>
    %293 = arith.addf %291, %292 : vector<2x128xf32>
    %cst_76 = arith.constant 5.000000e-01 : f32
    %294 = vector.broadcast %cst_76 : f32 to vector<2x128xf32>
    %295 = arith.mulf %294, %293 : vector<2x128xf32>
    %296 = vector.extract_strided_slice %295 {offsets = [0, 0], sizes = [2, 32], strides = [1, 1]} : vector<2x128xf32> to vector<2x32xf32>
    %297 = vector.extract_strided_slice %295 {offsets = [0, 32], sizes = [2, 32], strides = [1, 1]} : vector<2x128xf32> to vector<2x32xf32>
    %298 = vector.extract_strided_slice %295 {offsets = [0, 96], sizes = [2, 32], strides = [1, 1]} : vector<2x128xf32> to vector<2x32xf32>
    %299 = vector.extract_strided_slice %288 {offsets = [0, 64], sizes = [2, 32], strides = [1, 1]} : vector<2x128xf32> to vector<2x32xf32>
    %300 = math.tanh %299 : vector<2x32xf32>
    %301 = arith.mulf %297, %261 : vector<2x32xf32>
    %302 = arith.mulf %296, %300 : vector<2x32xf32>
    %303 = arith.addf %301, %302 : vector<2x32xf32>
    %304 = math.tanh %303 : vector<2x32xf32>
    %305 = arith.mulf %298, %304 : vector<2x32xf32>
    %cst_77 = arith.constant dense<0.000000e+00> : vector<2x128xf32>
    %306 = tpu.matmul %282, %1, %cst_77 {dimension_numbers = #tpu.dot_dimension_numbers<[1], [0], [0], [1], [0, 0, 1, 1], [], []>} : vector<2x32xf32>, vector<32x128xf32>, vector<2x128xf32> -> vector<2x128xf32>
    %307 = arith.addf %285, %306 : vector<2x128xf32>
    %cst_78 = arith.constant 5.000000e-01 : f32
    %308 = vector.broadcast %cst_78 : f32 to vector<2x128xf32>
    %309 = arith.mulf %308, %307 : vector<2x128xf32>
    %310 = math.tanh %309 : vector<2x128xf32>
    %cst_79 = arith.constant 1.000000e+00 : f32
    %311 = vector.broadcast %cst_79 : f32 to vector<2x128xf32>
    %312 = arith.addf %310, %311 : vector<2x128xf32>
    %cst_80 = arith.constant 5.000000e-01 : f32
    %313 = vector.broadcast %cst_80 : f32 to vector<2x128xf32>
    %314 = arith.mulf %313, %312 : vector<2x128xf32>
    %315 = vector.extract_strided_slice %314 {offsets = [0, 0], sizes = [2, 32], strides = [1, 1]} : vector<2x128xf32> to vector<2x32xf32>
    %316 = vector.extract_strided_slice %314 {offsets = [0, 32], sizes = [2, 32], strides = [1, 1]} : vector<2x128xf32> to vector<2x32xf32>
    %317 = vector.extract_strided_slice %314 {offsets = [0, 96], sizes = [2, 32], strides = [1, 1]} : vector<2x128xf32> to vector<2x32xf32>
    %318 = vector.extract_strided_slice %307 {offsets = [0, 64], sizes = [2, 32], strides = [1, 1]} : vector<2x128xf32> to vector<2x32xf32>
    %319 = math.tanh %318 : vector<2x32xf32>
    %320 = arith.mulf %316, %280 : vector<2x32xf32>
    %321 = arith.mulf %315, %319 : vector<2x32xf32>
    %322 = arith.addf %320, %321 : vector<2x32xf32>
    %323 = math.tanh %322 : vector<2x32xf32>
    %324 = arith.mulf %317, %323 : vector<2x32xf32>
    %cst_81 = arith.constant dense<0.000000e+00> : vector<2x128xf32>
    %325 = tpu.matmul %305, %2, %cst_81 {dimension_numbers = #tpu.dot_dimension_numbers<[1], [0], [0], [1], [0, 0, 1, 1], [], []>} : vector<2x32xf32>, vector<32x128xf32>, vector<2x128xf32> -> vector<2x128xf32>
    %326 = vector.broadcast %3 : vector<1x128xf32> to vector<2x128xf32>
    %327 = arith.addf %325, %326 : vector<2x128xf32>
    %cst_82 = arith.constant dense<0.000000e+00> : vector<2x128xf32>
    %328 = tpu.matmul %324, %1, %cst_82 {dimension_numbers = #tpu.dot_dimension_numbers<[1], [0], [0], [1], [0, 0, 1, 1], [], []>} : vector<2x32xf32>, vector<32x128xf32>, vector<2x128xf32> -> vector<2x128xf32>
    %329 = arith.addf %327, %328 : vector<2x128xf32>
    %cst_83 = arith.constant 5.000000e-01 : f32
    %330 = vector.broadcast %cst_83 : f32 to vector<2x128xf32>
    %331 = arith.mulf %330, %329 : vector<2x128xf32>
    %332 = math.tanh %331 : vector<2x128xf32>
    %cst_84 = arith.constant 1.000000e+00 : f32
    %333 = vector.broadcast %cst_84 : f32 to vector<2x128xf32>
    %334 = arith.addf %332, %333 : vector<2x128xf32>
    %cst_85 = arith.constant 5.000000e-01 : f32
    %335 = vector.broadcast %cst_85 : f32 to vector<2x128xf32>
    %336 = arith.mulf %335, %334 : vector<2x128xf32>
    %337 = vector.extract_strided_slice %336 {offsets = [0, 0], sizes = [2, 32], strides = [1, 1]} : vector<2x128xf32> to vector<2x32xf32>
    %338 = vector.extract_strided_slice %336 {offsets = [0, 32], sizes = [2, 32], strides = [1, 1]} : vector<2x128xf32> to vector<2x32xf32>
    %339 = vector.extract_strided_slice %336 {offsets = [0, 96], sizes = [2, 32], strides = [1, 1]} : vector<2x128xf32> to vector<2x32xf32>
    %340 = vector.extract_strided_slice %329 {offsets = [0, 64], sizes = [2, 32], strides = [1, 1]} : vector<2x128xf32> to vector<2x32xf32>
    %341 = math.tanh %340 : vector<2x32xf32>
    %342 = arith.mulf %338, %322 : vector<2x32xf32>
    %343 = arith.mulf %337, %341 : vector<2x32xf32>
    %344 = arith.addf %342, %343 : vector<2x32xf32>
    %345 = math.tanh %344 : vector<2x32xf32>
    %346 = arith.mulf %339, %345 : vector<2x32xf32>
    %c0_86 = arith.constant 0 : index
    %c0_87 = arith.constant 0 : index
    %347 = vector.load %arg8[%c0_86, %c0_87] : memref<32x128xf32, #tpu.memory_space<vmem>>, vector<32x128xf32>
    %cst_88 = arith.constant dense<0.000000e+00> : vector<2x128xf32>
    %348 = tpu.matmul %346, %347, %cst_88 {dimension_numbers = #tpu.dot_dimension_numbers<[1], [0], [0], [1], [0, 0, 1, 1], [], []>} : vector<2x32xf32>, vector<32x128xf32>, vector<2x128xf32> -> vector<2x128xf32>
    %c0_89 = arith.constant 0 : index
    %c0_90 = arith.constant 0 : index
    %349 = vector.load %arg9[%c0_89, %c0_90] : memref<1x128xf32, #tpu.memory_space<vmem>>, vector<1x128xf32>
    %350 = vector.broadcast %349 : vector<1x128xf32> to vector<2x128xf32>
    %351 = arith.addf %348, %350 : vector<2x128xf32>
    %c0_91 = arith.constant 0 : index
    %c0_92 = arith.constant 0 : index
    %352 = vector.load %arg10[%c0_91, %c0_92] : memref<2x128xf32, #tpu.memory_space<vmem>>, vector<2x128xf32>
    tpu.vector_store %arg10[%c0_91, %c0_92], %351 {strides = array<i32>} : memref<2x128xf32, #tpu.memory_space<vmem>>, vector<2x128xf32>,
    return
  }
  func.func @transform_0(%arg0: i32) -> (i32, i32) {
    %c0_i32 = arith.constant 0 : i32
    %c0_i32_0 = arith.constant 0 : i32
    %c0_i32_1 = arith.constant 0 : i32
    return %c0_i32, %c0_i32_0 : i32, i32
  }
  func.func @transform_1(%arg0: i32) -> (i32, i32) {
    %c0_i32 = arith.constant 0 : i32
    %c0_i32_0 = arith.constant 0 : i32
    %c0_i32_1 = arith.constant 0 : i32
    return %c0_i32, %c0_i32_0 : i32, i32
  }
  func.func @transform_2(%arg0: i32) -> (i32, i32) {
    %c0_i32 = arith.constant 0 : i32
    %c0_i32_0 = arith.constant 0 : i32
    %c0_i32_1 = arith.constant 0 : i32
    return %c0_i32, %c0_i32_0 : i32, i32
  }
  func.func @transform_3(%arg0: i32) -> (i32, i32) {
    %c0_i32 = arith.constant 0 : i32
    %c0_i32_0 = arith.constant 0 : i32
    %c0_i32_1 = arith.constant 0 : i32
    return %c0_i32, %c0_i32_0 : i32, i32
  }
  func.func @transform_4(%arg0: i32) -> (i32, i32) {
    %c0_i32 = arith.constant 0 : i32
    %c0_i32_0 = arith.constant 0 : i32
    %c0_i32_1 = arith.constant 0 : i32
    return %c0_i32, %c0_i32_0 : i32, i32
  }
  func.func @transform_5(%arg0: i32) -> (i32, i32) {
    %c0_i32 = arith.constant 0 : i32
    %c0_i32_0 = arith.constant 0 : i32
    %c0_i32_1 = arith.constant 0 : i32
    return %c0_i32, %c0_i32_0 : i32, i32
  }
  func.func @transform_6(%arg0: i32) -> (i32, i32) {
    %c0_i32 = arith.constant 0 : i32
    %c0_i32_0 = arith.constant 0 : i32
    %c0_i32_1 = arith.constant 0 : i32
    return %c0_i32, %c0_i32_0 : i32, i32
  }
  func.func @transform_7(%arg0: i32) -> (i32, i32) {
    %c0_i32 = arith.constant 0 : i32
    %c0_i32_0 = arith.constant 0 : i32
    %c0_i32_1 = arith.constant 0 : i32
    return %c0_i32, %c0_i32_0 : i32, i32
  }
  func.func @transform_8(%arg0: i32) -> (i32, i32) {
    %c0_i32 = arith.constant 0 : i32
    %c0_i32_0 = arith.constant 0 : i32
    %c0_i32_1 = arith.constant 0 : i32
    return %c0_i32, %c0_i32_0 : i32, i32
  }
  func.func @transform_9(%arg0: i32) -> (i32, i32) {
    %c0_i32 = arith.constant 0 : i32
    %c0_i32_0 = arith.constant 0 : i32
    %c0_i32_1 = arith.constant 0 : i32
    return %c0_i32, %c0_i32_0 : i32, i32
  }
}

</mosaic_0001>

<llo_original>
// kernel: tpu_custom_call.1
$region0: #{tpu_custom_call.1}
  #allocation0 [shape = 'u32[]', space=smem, size = 0x4, offset = 0x4, fixed_abs, tag = 'smem constant byte address 0x4 - core index']
  #allocation1 [shape = 'u32[144,128]{1,0:T(1,128)}', space=vmem, size = 0x12000, scoped, tag = 'internal scratch']
  %s0 = inlined_call_operand.hbm [shape: f32[16,16], index: 0, kind: input, shape index: {}]
  %s1 = inlined_call_operand.hbm [shape: f32[16,128], index: 1, kind: input, shape index: {}]
  %s2 = inlined_call_operand.hbm [shape: f32[32,128], index: 2, kind: input, shape index: {}]
  %s3 = inlined_call_operand.vmem [shape: f32[1,128], index: 3, kind: input, shape index: {}]
  %s4 = inlined_call_operand.hbm [shape: f32[32,128], index: 4, kind: input, shape index: {}]
  %s5 = inlined_call_operand.hbm [shape: f32[32,128], index: 5, kind: input, shape index: {}]
  %s6 = inlined_call_operand.vmem [shape: f32[1,128], index: 6, kind: input, shape index: {}]
  %s7 = inlined_call_operand.hbm [shape: f32[32,128], index: 7, kind: input, shape index: {}]
  %s8 = inlined_call_operand.vmem [shape: f32[1,128], index: 8, kind: input, shape index: {}]
  %s9 = inlined_call_operand.hbm [shape: f32[2,128], index: 9, kind: output, shape index: {}]
  %s10 = sld [smem:[#allocation0]]
  $region70: #{tpu_custom_call.1} parent=0
    _
  %s12 = ssub.s32 1, %s10
  %s13 = scalar_select 0, %s12, %s10
  $region1: #{tpu_custom_call.1} parent=0
    #allocation2 [shape = 'u8[8192]{0}', space=vmem, size = 0x2000, scoped, tag = 'input window, operand 0, single buffered']
    #allocation3 [shape = 's32[1]{0}', space=sflag, size = 0x4, scoped, tag = 'scoped memory for tpu_custom_call.1']
    #allocation4 [shape = 's32[1]{0}', space=sflag, size = 0x4, scoped, tag = 'scoped memory for tpu_custom_call.1']
    #allocation5 [shape = 'u8[8192]{0}', space=vmem, size = 0x2000, scoped, tag = 'input window, operand 1, single buffered']
    #allocation6 [shape = 's32[1]{0}', space=sflag, size = 0x4, scoped, tag = 'scoped memory for tpu_custom_call.1']
    #allocation7 [shape = 'u8[16384]{0}', space=vmem, size = 0x4000, scoped, tag = 'input window, operand 2, single buffered']
    #allocation8 [shape = 'u8[16384]{0}', space=vmem, size = 0x4000, scoped, tag = 'input window, operand 4, single buffered']
    #allocation9 [shape = 's32[1]{0}', space=sflag, size = 0x4, scoped, tag = 'scoped memory for tpu_custom_call.1']
    #allocation10 [shape = 'u8[16384]{0}', space=vmem, size = 0x4000, scoped, tag = 'input window, operand 5, single buffered']
    #allocation11 [shape = 'u8[16384]{0}', space=vmem, size = 0x4000, scoped, tag = 'input window, operand 7, single buffered']
    #allocation12 [shape = 's32[1]{0}', space=sflag, size = 0x4, scoped, tag = 'scoped memory for tpu_custom_call.1']
    #allocation13 [shape = 'u8[1024]{0}', space=vmem, size = 0x400, scoped, tag = 'output window, operand 0, single buffered']
    %14 = vsyncpa [#allocation3], 0
    %15 = vsyncpa [#allocation6], 0
    %16 = vsyncpa [#allocation9], 0
    %17 = vsyncpa [#allocation12], 0
    %18 = vsyncpa [#allocation4], 0
    // Predicated region
    $region2: #{tpu_custom_call.1} parent=1 // pred_check
      _
    $region3: #{tpu_custom_call.1} parent=1 // pred_check_branch
      %20 = sbr.rel (0) target = $region5
    $region4: #{tpu_custom_call.1} parent=1 // pred_region
      %s22 = ssub.s32 256, 256
      %23 = vsyncadd [#allocation3], %s22
      %s24 = sshll.u32 [#allocation2], 4
      %s25 = int_to_ptr.vmem [resolvable:$true] %s24
      %30 = dma.hbm_to_vmem [thread:$0]  %s0, 256, %s25, [#allocation3], 128, 128, 8
    $region5: #{tpu_custom_call.1} parent=1 // pred_fallthru
      _
    // Predicated region
    $region6: #{tpu_custom_call.1} parent=1 // pred_check
      _
    $region7: #{tpu_custom_call.1} parent=1 // pred_check_branch
      %32 = sbr.rel (0) target = $region9
    $region8: #{tpu_custom_call.1} parent=1 // pred_region
      %s34 = ssub.s32 256, 256
      %35 = vsyncadd [#allocation6], %s34
      %s36 = sshll.u32 [#allocation5], 4
      %s37 = int_to_ptr.vmem [resolvable:$true] %s36
      %42 = dma.hbm_to_vmem [thread:$0]  %s1, 256, %s37, [#allocation6], 128, 128, 8
    $region9: #{tpu_custom_call.1} parent=1 // pred_fallthru
      _
    // Predicated region
    $region10: #{tpu_custom_call.1} parent=1 // pred_check
      _
    $region11: #{tpu_custom_call.1} parent=1 // pred_check_branch
      %44 = sbr.rel (0) target = $region13
    $region12: #{tpu_custom_call.1} parent=1 // pred_region
      %s46 = ssub.s32 512, 512
      %47 = vsyncadd [#allocation6], %s46
      %s48 = sshll.u32 [#allocation7], 4
      %s49 = int_to_ptr.vmem [resolvable:$true] %s48
      %54 = dma.hbm_to_vmem [thread:$0]  %s2, 512, %s49, [#allocation6], 128, 128, 8
    $region13: #{tpu_custom_call.1} parent=1 // pred_fallthru
      _
    // Predicated region
    $region14: #{tpu_custom_call.1} parent=1 // pred_check
      _
    $region15: #{tpu_custom_call.1} parent=1 // pred_check_branch
      %56 = sbr.rel (0) target = $region17
    $region16: #{tpu_custom_call.1} parent=1 // pred_region
      _
    $region17: #{tpu_custom_call.1} parent=1 // pred_fallthru
      _
    // Predicated region
    $region18: #{tpu_custom_call.1} parent=1 // pred_check
      _
    $region19: #{tpu_custom_call.1} parent=1 // pred_check_branch
      %58 = sbr.rel (0) target = $region21
    $region20: #{tpu_custom_call.1} parent=1 // pred_region
      %s60 = ssub.s32 512, 512
      %61 = vsyncadd [#allocation9], %s60
      %s62 = sshll.u32 [#allocation8], 4
      %s63 = int_to_ptr.vmem [resolvable:$true] %s62
      %68 = dma.hbm_to_vmem [thread:$0]  %s4, 512, %s63, [#allocation9], 128, 128, 8
    $region21: #{tpu_custom_call.1} parent=1 // pred_fallthru
      _
    // Predicated region
    $region22: #{tpu_custom_call.1} parent=1 // pred_check
      _
    $region23: #{tpu_custom_call.1} parent=1 // pred_check_branch
      %70 = sbr.rel (0) target = $region25
    $region24: #{tpu_custom_call.1} parent=1 // pred_region
      %s72 = ssub.s32 512, 512
      %73 = vsyncadd [#allocation9], %s72
      %s74 = sshll.u32 [#allocation10], 4
      %s75 = int_to_ptr.vmem [resolvable:$true] %s74
      %80 = dma.hbm_to_vmem [thread:$0]  %s5, 512, %s75, [#allocation9], 128, 128, 8
    $region25: #{tpu_custom_call.1} parent=1 // pred_fallthru
      _
    // Predicated region
    $region26: #{tpu_custom_call.1} parent=1 // pred_check
      _
    $region27: #{tpu_custom_call.1} parent=1 // pred_check_branch
      %82 = sbr.rel (0) target = $region29
    $region28: #{tpu_custom_call.1} parent=1 // pred_region
      _
    $region29: #{tpu_custom_call.1} parent=1 // pred_fallthru
      _
    // Predicated region
    $region30: #{tpu_custom_call.1} parent=1 // pred_check
      _
    $region31: #{tpu_custom_call.1} parent=1 // pred_check_branch
      %84 = sbr.rel (0) target = $region33
    $region32: #{tpu_custom_call.1} parent=1 // pred_region
      %s86 = ssub.s32 512, 512
      %87 = vsyncadd [#allocation12], %s86
      %s88 = sshll.u32 [#allocation11], 4
      %s89 = int_to_ptr.vmem [resolvable:$true] %s88
      %94 = dma.hbm_to_vmem [thread:$0]  %s7, 512, %s89, [#allocation12], 128, 128, 8
    $region33: #{tpu_custom_call.1} parent=1 // pred_fallthru
      _
    // Predicated region
    $region34: #{tpu_custom_call.1} parent=1 // pred_check
      _
    $region35: #{tpu_custom_call.1} parent=1 // pred_check_branch
      %96 = sbr.rel (0) target = $region37
    $region36: #{tpu_custom_call.1} parent=1 // pred_region
      _
    $region37: #{tpu_custom_call.1} parent=1 // pred_fallthru
      _
    // Predicated region
    $region38: #{tpu_custom_call.1} parent=1 // pred_check
      _
    $region39: #{tpu_custom_call.1} parent=1 // pred_check_branch
      %98 = sbr.rel (0) target = $region41
    $region40: #{tpu_custom_call.1} parent=1 // pred_region
      %99 = dma.done [#allocation3], 256
    $region41: #{tpu_custom_call.1} parent=1 // pred_fallthru
      _
    // Predicated region
    $region42: #{tpu_custom_call.1} parent=1 // pred_check
      _
    $region43: #{tpu_custom_call.1} parent=1 // pred_check_branch
      %101 = sbr.rel (0) target = $region45
    $region44: #{tpu_custom_call.1} parent=1 // pred_region
      %102 = dma.done [#allocation6], 256
    $region45: #{tpu_custom_call.1} parent=1 // pred_fallthru
      _
    // Predicated region
    $region46: #{tpu_custom_call.1} parent=1 // pred_check
      _
    $region47: #{tpu_custom_call.1} parent=1 // pred_check_branch
      %104 = sbr.rel (0) target = $region49
    $region48: #{tpu_custom_call.1} parent=1 // pred_region
      %105 = dma.done [#allocation6], 512
    $region49: #{tpu_custom_call.1} parent=1 // pred_fallthru
      _
    // Predicated region
    $region50: #{tpu_custom_call.1} parent=1 // pred_check
      _
    $region51: #{tpu_custom_call.1} parent=1 // pred_check_branch
      %107 = sbr.rel (0) target = $region53
    $region52: #{tpu_custom_call.1} parent=1 // pred_region
      %108 = dma.done [#allocation9], 512
    $region53: #{tpu_custom_call.1} parent=1 // pred_fallthru
      _
    // Predicated region
    $region54: #{tpu_custom_call.1} parent=1 // pred_check
      _
    $region55: #{tpu_custom_call.1} parent=1 // pred_check_branch
      %110 = sbr.rel (0) target = $region57
    $region56: #{tpu_custom_call.1} parent=1 // pred_region
      %111 = dma.done [#allocation9], 512
    $region57: #{tpu_custom_call.1} parent=1 // pred_fallthru
      _
    // Predicated region
    $region58: #{tpu_custom_call.1} parent=1 // pred_check
      _
    $region59: #{tpu_custom_call.1} parent=1 // pred_check_branch
      %113 = sbr.rel (0) target = $region61
    $region60: #{tpu_custom_call.1} parent=1 // pred_region
      %114 = dma.done [#allocation12], 512
    $region61: #{tpu_custom_call.1} parent=1 // pred_fallthru
      _
    %v115 = vld [vmem:[#allocation7] sm:$0xff]
    %v116 = vld [vmem:[#allocation7 + $0x8] sm:$0xff]
    %v117 = vld [vmem:[#allocation7 + $0x10] sm:$0xff]
    %v118 = vld [vmem:[#allocation7 + $0x18] sm:$0xff]
    %v119 = vld [vmem:[#allocation10] sm:$0xff]
    %v120 = vld [vmem:[#allocation10 + $0x8] sm:$0xff]
    %v121 = vld [vmem:[#allocation10 + $0x10] sm:$0xff]
    %v122 = vld [vmem:[#allocation10 + $0x18] sm:$0xff]
    %v123 = vld [vmem:[#allocation8] sm:$0xff]
    %v124 = vld [vmem:[#allocation8 + $0x8] sm:$0xff]
    %v125 = vld [vmem:[#allocation8 + $0x10] sm:$0xff]
    %v126 = vld [vmem:[#allocation8 + $0x18] sm:$0xff]
    %v127 = vld [vmem:[%s6] sm:$0x1]
    %v128 = vld [vmem:[#allocation2] sm:$0xff]
    %v129 = vld [vmem:[#allocation2 + $0x8] sm:$0xff]
    %v130 = vld [vmem:[#allocation5] sm:$0xff]
    %v131 = vld [vmem:[#allocation5 + $0x8] sm:$0xff]
    %v132 = vld [vmem:[%s3] sm:$0x1]
    %v134 = vlaneseq
    %v135 = vshrl.u32 %v134, 7
    %v136 = vsub.s32 0, %v135
    %v137 = vrot.slane %v132, %v136
    %vm139 = vcmask 130048
    %v141 = vsel %vm139, %v128, 0
    %v144 = vsel %vm139, %v129, 0
    %146 = vmatprep.subr.mxu0 0.0
    %147 = vmatpush1.msra.mxu0 %v130
    %148 = vmatprep.subr.mxu0 0.0
    %149 = vmatpush1.msra.mxu0 %v131
    %150 = vmatprep.subr.mxu0 0.0
    %151 = vmatpush1.msra.mxu0 0.0
    %152 = vmatprep.subr.mxu0 0.0
    %153 = vmatpush1.msra.mxu0 0.0
    %154 = vmatprep.subr.mxu0 0.0
    %155 = vmatpush1.msra.mxu0 0.0
    %156 = vmatprep.subr.mxu0 0.0
    %157 = vmatpush1.msra.mxu0 0.0
    %158 = vmatprep.subr.mxu0 0.0
    %159 = vmatpush1.msra.mxu0 0.0
    %160 = vmatprep.subr.mxu0 0.0
    %161 = vmatpush1.msra.mxu0 0.0
    %162 = vmatprep.subr.mxu0 0.0
    %163 = vmatpush1.msra.mxu0 0.0
    %164 = vmatprep.subr.mxu0 0.0
    %165 = vmatpush1.msra.mxu0 0.0
    %166 = vmatprep.subr.mxu0 0.0
    %167 = vmatpush1.msra.mxu0 0.0
    %168 = vmatprep.subr.mxu0 0.0
    %169 = vmatpush1.msra.mxu0 0.0
    %170 = vmatprep.subr.mxu0 0.0
    %171 = vmatpush1.msra.mxu0 0.0
    %172 = vmatprep.subr.mxu0 0.0
    %173 = vmatpush1.msra.mxu0 0.0
    %174 = vmatprep.subr.mxu0 0.0
    %175 = vmatpush1.msra.mxu0 0.0
    %176 = vmatprep.subr.mxu0 0.0
    %177 = vmatpush1.msra.mxu0 0.0
    %178 = vmatprep.subr.mxu0 0.0
    %179 = vmatpush1.msra.mxu0 0.0
    %180 = vmatprep.subr.mxu0 0.0
    %181 = vmatpush1.msra.mxu0 0.0
    %182 = vmatprep.subr.mxu0 0.0
    %183 = vmatpush1.msra.mxu0 0.0
    %184 = vmatprep.subr.mxu0 0.0
    %185 = vmatpush1.msra.mxu0 0.0
    %186 = vmatprep.subr.mxu0 0.0
    %187 = vmatpush1.msra.mxu0 0.0
    %188 = vmatprep.subr.mxu0 0.0
    %189 = vmatpush1.msra.mxu0 0.0
    %190 = vmatprep.subr.mxu0 0.0
    %191 = vmatpush1.msra.mxu0 0.0
    %192 = vmatprep.subr.mxu0 0.0
    %193 = vmatpush1.msra.mxu0 0.0
    %194 = vmatprep.subr.mxu0 0.0
    %195 = vmatpush1.msra.mxu0 0.0
    %196 = vmatprep.subr.mxu0 0.0
    %197 = vmatpush1.msra.mxu0 0.0
    %198 = vmatprep.subr.mxu0 0.0
    %199 = vmatpush1.msra.mxu0 0.0
    %200 = vmatprep.subr.mxu0 0.0
    %201 = vmatpush1.msra.mxu0 0.0
    %202 = vmatprep.subr.mxu0 0.0
    %203 = vmatpush1.msra.mxu0 0.0
    %204 = vmatprep.subr.mxu0 0.0
    %205 = vmatpush1.msra.mxu0 0.0
    %206 = vmatprep.subr.mxu0 0.0
    %207 = vmatpush1.msra.mxu0 0.0
    %208 = vmatprep.subr.mxu0 0.0
    %209 = vmatpush1.msra.mxu0 0.0
    %210 = vmatprep.mubr.f32.mxu0 0.0
    %211 = vmatmul.mubr.f32.gmra.mrb[0].mxu0 %v141
    %v212 = vpop.f32.mrb[0].mxu0
    %v213 = vadd.f32 %v137, %v212
    %v214 = vpop.f32.mrb[0].mxu0
    %215 = vmatprep.mubr.f32.mxu0 0.0
    %216 = vmatmul.mubr.f32.gmra.mrb[0].mxu0 %v144
    %v217 = vpop.f32.mrb[0].mxu0
    %v218 = vadd.f32 %v137, %v217
    %v219 = vpop.f32.mrb[0].mxu0
    %220 = vdwg.mxu0
    %vm221 = vcmask 261120
    %v223 = vsel %vm221, 0.0, 0
    %225 = vmatprep.subr.mxu0 0.0
    %226 = vmatpush1.msra.mxu0 %v115
    %227 = vmatprep.subr.mxu0 0.0
    %228 = vmatpush1.msra.mxu0 %v116
    %229 = vmatprep.subr.mxu0 0.0
    %230 = vmatpush1.msra.mxu0 %v117
    %231 = vmatprep.subr.mxu0 0.0
    %232 = vmatpush1.msra.mxu0 %v118
    %233 = vmatprep.subr.mxu0 0.0
    %234 = vmatpush1.msra.mxu0 0.0
    %235 = vmatprep.subr.mxu0 0.0
    %236 = vmatpush1.msra.mxu0 0.0
    %237 = vmatprep.subr.mxu0 0.0
    %238 = vmatpush1.msra.mxu0 0.0
    %239 = vmatprep.subr.mxu0 0.0
    %240 = vmatpush1.msra.mxu0 0.0
    %241 = vmatprep.subr.mxu0 0.0
    %242 = vmatpush1.msra.mxu0 0.0
    %243 = vmatprep.subr.mxu0 0.0
    %244 = vmatpush1.msra.mxu0 0.0
    %245 = vmatprep.subr.mxu0 0.0
    %246 = vmatpush1.msra.mxu0 0.0
    %247 = vmatprep.subr.mxu0 0.0
    %248 = vmatpush1.msra.mxu0 0.0
    %249 = vmatprep.subr.mxu0 0.0
    %250 = vmatpush1.msra.mxu0 0.0
    %251 = vmatprep.subr.mxu0 0.0
    %252 = vmatpush1.msra.mxu0 0.0
    %253 = vmatprep.subr.mxu0 0.0
    %254 = vmatpush1.msra.mxu0 0.0
    %255 = vmatprep.subr.mxu0 0.0
    %256 = vmatpush1.msra.mxu0 0.0
    %257 = vmatprep.subr.mxu0 0.0
    %258 = vmatpush1.msra.mxu0 0.0
    %259 = vmatprep.subr.mxu0 0.0
    %260 = vmatpush1.msra.mxu0 0.0
    %261 = vmatprep.subr.mxu0 0.0
    %262 = vmatpush1.msra.mxu0 0.0
    %263 = vmatprep.subr.mxu0 0.0
    %264 = vmatpush1.msra.mxu0 0.0
    %265 = vmatprep.subr.mxu0 0.0
    %266 = vmatpush1.msra.mxu0 0.0
    %267 = vmatprep.subr.mxu0 0.0
    %268 = vmatpush1.msra.mxu0 0.0
    %269 = vmatprep.subr.mxu0 0.0
    %270 = vmatpush1.msra.mxu0 0.0
    %271 = vmatprep.subr.mxu0 0.0
    %272 = vmatpush1.msra.mxu0 0.0
    %273 = vmatprep.subr.mxu0 0.0
    %274 = vmatpush1.msra.mxu0 0.0
    %275 = vmatprep.subr.mxu0 0.0
    %276 = vmatpush1.msra.mxu0 0.0
    %277 = vmatprep.subr.mxu0 0.0
    %278 = vmatpush1.msra.mxu0 0.0
    %279 = vmatprep.subr.mxu0 0.0
    %280 = vmatpush1.msra.mxu0 0.0
    %281 = vmatprep.subr.mxu0 0.0
    %282 = vmatpush1.msra.mxu0 0.0
    %283 = vmatprep.subr.mxu0 0.0
    %284 = vmatpush1.msra.mxu0 0.0
    %285 = vmatprep.subr.mxu0 0.0
    %286 = vmatpush1.msra.mxu0 0.0
    %287 = vmatprep.subr.mxu0 0.0
    %288 = vmatpush1.msra.mxu0 0.0
    %289 = vmatprep.mubr.f32.mxu0 0.0
    %290 = vmatmul.mubr.f32.gmra.mrb[0].mxu0 %v223
    %v291 = vpop.f32.mrb[0].mxu0
    %v292 = vadd.f32 0.0, %v291
    %v293 = vpop.f32.mrb[0].mxu0
    %294 = vdwg.mxu0
    %v295 = vadd.f32 %v213, %v292
    %v296 = vmul.f32 %v295, 0.5
    %v297 = vtanh.pop %v296
    %v298 = vadd.f32 %v297, 1.0
    %v299 = vmul.f32 %v298, 0.5
    %v300 = vtanh.pop %v295
    %v301 = vmul.f32 %v299, 0.0
    %303 = vrot.lane.b32.xlu0 %v300, 64
    %v304 = vpop.permute.xlu0 %303
    %v306 = vmul.f32 %v299, %v304
    %308 = vrot.lane.b32.xlu0 %v306, 32
    %v309 = vpop.permute.xlu0 %308
    %v311 = vadd.f32 %v301, %v309
    %v312 = vtanh.pop %v311
    %314 = vrot.lane.b32.xlu0 %v312, 64
    %v315 = vpop.permute.xlu0 %314
    %v317 = vmul.f32 %v299, %v315
    %v319 = vlaneseq
    %v320 = vshrl.u32 %v319, 7
    %v321 = vsub.s32 0, %v320
    %v322 = vrot.slane %v127, %v321
    %325 = vrot.lane.b32.xlu0 %v317, 32
    %v326 = vpop.permute.xlu0 %325
    %v327 = vsel %vm221, %v326, 0
    %329 = vmatprep.subr.mxu0 0.0
    %330 = vmatpush1.msra.mxu0 %v123
    %331 = vmatprep.subr.mxu0 0.0
    %332 = vmatpush1.msra.mxu0 %v124
    %333 = vmatprep.subr.mxu0 0.0
    %334 = vmatpush1.msra.mxu0 %v125
    %335 = vmatprep.subr.mxu0 0.0
    %336 = vmatpush1.msra.mxu0 %v126
    %337 = vmatprep.subr.mxu0 0.0
    %338 = vmatpush1.msra.mxu0 0.0
    %339 = vmatprep.subr.mxu0 0.0
    %340 = vmatpush1.msra.mxu0 0.0
    %341 = vmatprep.subr.mxu0 0.0
    %342 = vmatpush1.msra.mxu0 0.0
    %343 = vmatprep.subr.mxu0 0.0
    %344 = vmatpush1.msra.mxu0 0.0
    %345 = vmatprep.subr.mxu0 0.0
    %346 = vmatpush1.msra.mxu0 0.0
    %347 = vmatprep.subr.mxu0 0.0
    %348 = vmatpush1.msra.mxu0 0.0
    %349 = vmatprep.subr.mxu0 0.0
    %350 = vmatpush1.msra.mxu0 0.0
    %351 = vmatprep.subr.mxu0 0.0
    %352 = vmatpush1.msra.mxu0 0.0
    %353 = vmatprep.subr.mxu0 0.0
    %354 = vmatpush1.msra.mxu0 0.0
    %355 = vmatprep.subr.mxu0 0.0
    %356 = vmatpush1.msra.mxu0 0.0
    %357 = vmatprep.subr.mxu0 0.0
    %358 = vmatpush1.msra.mxu0 0.0
    %359 = vmatprep.subr.mxu0 0.0
    %360 = vmatpush1.msra.mxu0 0.0
    %361 = vmatprep.subr.mxu0 0.0
    %362 = vmatpush1.msra.mxu0 0.0
    %363 = vmatprep.subr.mxu0 0.0
    %364 = vmatpush1.msra.mxu0 0.0
    %365 = vmatprep.subr.mxu0 0.0
    %366 = vmatpush1.msra.mxu0 0.0
    %367 = vmatprep.subr.mxu0 0.0
    %368 = vmatpush1.msra.mxu0 0.0
    %369 = vmatprep.subr.mxu0 0.0
    %370 = vmatpush1.msra.mxu0 0.0
    %371 = vmatprep.subr.mxu0 0.0
    %372 = vmatpush1.msra.mxu0 0.0
    %373 = vmatprep.subr.mxu0 0.0
    %374 = vmatpush1.msra.mxu0 0.0
    %375 = vmatprep.subr.mxu0 0.0
    %376 = vmatpush1.msra.mxu0 0.0
    %377 = vmatprep.subr.mxu0 0.0
    %378 = vmatpush1.msra.mxu0 0.0
    %379 = vmatprep.subr.mxu0 0.0
    %380 = vmatpush1.msra.mxu0 0.0
    %381 = vmatprep.subr.mxu0 0.0
    %382 = vmatpush1.msra.mxu0 0.0
    %383 = vmatprep.subr.mxu0 0.0
    %384 = vmatpush1.msra.mxu0 0.0
    %385 = vmatprep.subr.mxu0 0.0
    %386 = vmatpush1.msra.mxu0 0.0
    %387 = vmatprep.subr.mxu0 0.0
    %388 = vmatpush1.msra.mxu0 0.0
    %389 = vmatprep.subr.mxu0 0.0
    %390 = vmatpush1.msra.mxu0 0.0
    %391 = vmatprep.subr.mxu0 0.0
    %392 = vmatpush1.msra.mxu0 0.0
    %393 = vmatprep.mubr.f32.mxu0 0.0
    %394 = vmatmul.mubr.f32.gmra.mrb[0].mxu0 %v327
    %v395 = vpop.f32.mrb[0].mxu0
    %v396 = vadd.f32 %v322, %v395
    %v397 = vpop.f32.mrb[0].mxu0
    %398 = vdwg.mxu0
    %399 = vmatprep.subr.mxu0 0.0
    %400 = vmatpush1.msra.mxu0 %v115
    %401 = vmatprep.subr.mxu0 0.0
    %402 = vmatpush1.msra.mxu0 %v116
    %403 = vmatprep.subr.mxu0 0.0
    %404 = vmatpush1.msra.mxu0 %v117
    %405 = vmatprep.subr.mxu0 0.0
    %406 = vmatpush1.msra.mxu0 %v118
    %407 = vmatprep.subr.mxu0 0.0
    %408 = vmatpush1.msra.mxu0 0.0
    %409 = vmatprep.subr.mxu0 0.0
    %410 = vmatpush1.msra.mxu0 0.0
    %411 = vmatprep.subr.mxu0 0.0
    %412 = vmatpush1.msra.mxu0 0.0
    %413 = vmatprep.subr.mxu0 0.0
    %414 = vmatpush1.msra.mxu0 0.0
    %415 = vmatprep.subr.mxu0 0.0
    %416 = vmatpush1.msra.mxu0 0.0
    %417 = vmatprep.subr.mxu0 0.0
    %418 = vmatpush1.msra.mxu0 0.0
    %419 = vmatprep.subr.mxu0 0.0
    %420 = vmatpush1.msra.mxu0 0.0
    %421 = vmatprep.subr.mxu0 0.0
    %422 = vmatpush1.msra.mxu0 0.0
    %423 = vmatprep.subr.mxu0 0.0
    %424 = vmatpush1.msra.mxu0 0.0
    %425 = vmatprep.subr.mxu0 0.0
    %426 = vmatpush1.msra.mxu0 0.0
    %427 = vmatprep.subr.mxu0 0.0
    %428 = vmatpush1.msra.mxu0 0.0
    %429 = vmatprep.subr.mxu0 0.0
    %430 = vmatpush1.msra.mxu0 0.0
    %431 = vmatprep.subr.mxu0 0.0
    %432 = vmatpush1.msra.mxu0 0.0
    %433 = vmatprep.subr.mxu0 0.0
    %434 = vmatpush1.msra.mxu0 0.0
    %435 = vmatprep.subr.mxu0 0.0
    %436 = vmatpush1.msra.mxu0 0.0
    %437 = vmatprep.subr.mxu0 0.0
    %438 = vmatpush1.msra.mxu0 0.0
    %439 = vmatprep.subr.mxu0 0.0
    %440 = vmatpush1.msra.mxu0 0.0
    %441 = vmatprep.subr.mxu0 0.0
    %442 = vmatpush1.msra.mxu0 0.0
    %443 = vmatprep.subr.mxu0 0.0
    %444 = vmatpush1.msra.mxu0 0.0
    %445 = vmatprep.subr.mxu0 0.0
    %446 = vmatpush1.msra.mxu0 0.0
    %447 = vmatprep.subr.mxu0 0.0
    %448 = vmatpush1.msra.mxu0 0.0
    %449 = vmatprep.subr.mxu0 0.0
    %450 = vmatpush1.msra.mxu0 0.0
    %451 = vmatprep.subr.mxu0 0.0
    %452 = vmatpush1.msra.mxu0 0.0
    %453 = vmatprep.subr.mxu0 0.0
    %454 = vmatpush1.msra.mxu0 0.0
    %455 = vmatprep.subr.mxu0 0.0
    %456 = vmatpush1.msra.mxu0 0.0
    %457 = vmatprep.subr.mxu0 0.0
    %458 = vmatpush1.msra.mxu0 0.0
    %459 = vmatprep.subr.mxu0 0.0
    %460 = vmatpush1.msra.mxu0 0.0
    %461 = vmatprep.subr.mxu0 0.0
    %462 = vmatpush1.msra.mxu0 0.0
    %463 = vmatprep.mubr.f32.mxu0 0.0
    %464 = vmatmul.mubr.f32.gmra.mrb[0].mxu0 %v327
    %v465 = vpop.f32.mrb[0].mxu0
    %v466 = vadd.f32 0.0, %v465
    %v467 = vpop.f32.mrb[0].mxu0
    %468 = vdwg.mxu0
    %v470 = vrot.slane %v466, 6
    %v472 = vadd.f32 %v213, %v470
    %v473 = vmul.f32 %v472, 0.5
    %v474 = vtanh.pop %v473
    %v475 = vadd.f32 %v474, 1.0
    %v476 = vmul.f32 %v475, 0.5
    %v477 = vtanh.pop %v472
    %v479 = vrot.slane %v311, 6
    %v481 = vmul.f32 %v476, %v479
    %483 = vrot.lane.b32.xlu0 %v477, 64
    %v484 = vpop.permute.xlu0 %483
    %v486 = vmul.f32 %v476, %v484
    %488 = vrot.lane.b32.xlu0 %v486, 32
    %v489 = vpop.permute.xlu0 %488
    %v491 = vadd.f32 %v481, %v489
    %v492 = vtanh.pop %v491
    %494 = vrot.lane.b32.xlu0 %v492, 64
    %v495 = vpop.permute.xlu0 %494
    %v497 = vmul.f32 %v476, %v495
    %498 = vmatprep.subr.mxu0 0.0
    %499 = vmatpush1.msra.mxu0 %v119
    %500 = vmatprep.subr.mxu0 0.0
    %501 = vmatpush1.msra.mxu0 %v120
    %502 = vmatprep.subr.mxu0 0.0
    %503 = vmatpush1.msra.mxu0 %v121
    %504 = vmatprep.subr.mxu0 0.0
    %505 = vmatpush1.msra.mxu0 %v122
    %506 = vmatprep.subr.mxu0 0.0
    %507 = vmatpush1.msra.mxu0 0.0
    %508 = vmatprep.subr.mxu0 0.0
    %509 = vmatpush1.msra.mxu0 0.0
    %510 = vmatprep.subr.mxu0 0.0
    %511 = vmatpush1.msra.mxu0 0.0
    %512 = vmatprep.subr.mxu0 0.0
    %513 = vmatpush1.msra.mxu0 0.0
    %514 = vmatprep.subr.mxu0 0.0
    %515 = vmatpush1.msra.mxu0 0.0
    %516 = vmatprep.subr.mxu0 0.0
    %517 = vmatpush1.msra.mxu0 0.0
    %518 = vmatprep.subr.mxu0 0.0
    %519 = vmatpush1.msra.mxu0 0.0
    %520 = vmatprep.subr.mxu0 0.0
    %521 = vmatpush1.msra.mxu0 0.0
    %522 = vmatprep.subr.mxu0 0.0
    %523 = vmatpush1.msra.mxu0 0.0
    %524 = vmatprep.subr.mxu0 0.0
    %525 = vmatpush1.msra.mxu0 0.0
    %526 = vmatprep.subr.mxu0 0.0
    %527 = vmatpush1.msra.mxu0 0.0
    %528 = vmatprep.subr.mxu0 0.0
    %529 = vmatpush1.msra.mxu0 0.0
    %530 = vmatprep.subr.mxu0 0.0
    %531 = vmatpush1.msra.mxu0 0.0
    %532 = vmatprep.subr.mxu0 0.0
    %533 = vmatpush1.msra.mxu0 0.0
    %534 = vmatprep.subr.mxu0 0.0
    %535 = vmatpush1.msra.mxu0 0.0
    %536 = vmatprep.subr.mxu0 0.0
    %537 = vmatpush1.msra.mxu0 0.0
    %538 = vmatprep.subr.mxu0 0.0
    %539 = vmatpush1.msra.mxu0 0.0
    %540 = vmatprep.subr.mxu0 0.0
    %541 = vmatpush1.msra.mxu0 0.0
    %542 = vmatprep.subr.mxu0 0.0
    %543 = vmatpush1.msra.mxu0 0.0
    %544 = vmatprep.subr.mxu0 0.0
    %545 = vmatpush1.msra.mxu0 0.0
    %546 = vmatprep.subr.mxu0 0.0
    %547 = vmatpush1.msra.mxu0 0.0
    %548 = vmatprep.subr.mxu0 0.0
    %549 = vmatpush1.msra.mxu0 0.0
    %550 = vmatprep.subr.mxu0 0.0
    %551 = vmatpush1.msra.mxu0 0.0
    %552 = vmatprep.subr.mxu0 0.0
    %553 = vmatpush1.msra.mxu0 0.0
    %554 = vmatprep.subr.mxu0 0.0
    %555 = vmatpush1.msra.mxu0 0.0
    %556 = vmatprep.subr.mxu0 0.0
    %557 = vmatpush1.msra.mxu0 0.0
    %558 = vmatprep.subr.mxu0 0.0
    %559 = vmatpush1.msra.mxu0 0.0
    %560 = vmatprep.subr.mxu0 0.0
    %561 = vmatpush1.msra.mxu0 0.0
    %562 = vmatprep.mubr.f32.mxu0 0.0
    %563 = vmatmul.mubr.f32.gmra.mrb[0].mxu0 %v223
    %v564 = vpop.f32.mrb[0].mxu0
    %v565 = vadd.f32 0.0, %v564
    %v566 = vpop.f32.mrb[0].mxu0
    %567 = vdwg.mxu0
    %v568 = vadd.f32 %v396, %v565
    %v569 = vmul.f32 %v568, 0.5
    %v570 = vtanh.pop %v569
    %v571 = vadd.f32 %v570, 1.0
    %v572 = vmul.f32 %v571, 0.5
    %v573 = vtanh.pop %v568
    %v574 = vmul.f32 %v572, 0.0
    %576 = vrot.lane.b32.xlu0 %v573, 64
    %v577 = vpop.permute.xlu0 %576
    %v579 = vmul.f32 %v572, %v577
    %581 = vrot.lane.b32.xlu0 %v579, 32
    %v582 = vpop.permute.xlu0 %581
    %v584 = vadd.f32 %v574, %v582
    %v585 = vtanh.pop %v584
    %587 = vrot.lane.b32.xlu0 %v585, 64
    %v588 = vpop.permute.xlu0 %587
    %v590 = vmul.f32 %v572, %v588
    %v592 = vrot.slane %v497, 2
    %593 = vrot.lane.b32.xlu0 %v592, 32
    %v594 = vpop.permute.xlu0 %593
    %v595 = vsel %vm221, %v594, 0
    %597 = vmatprep.subr.mxu0 0.0
    %598 = vmatpush1.msra.mxu0 %v123
    %599 = vmatprep.subr.mxu0 0.0
    %600 = vmatpush1.msra.mxu0 %v124
    %601 = vmatprep.subr.mxu0 0.0
    %602 = vmatpush1.msra.mxu0 %v125
    %603 = vmatprep.subr.mxu0 0.0
    %604 = vmatpush1.msra.mxu0 %v126
    %605 = vmatprep.subr.mxu0 0.0
    %606 = vmatpush1.msra.mxu0 0.0
    %607 = vmatprep.subr.mxu0 0.0
    %608 = vmatpush1.msra.mxu0 0.0
    %609 = vmatprep.subr.mxu0 0.0
    %610 = vmatpush1.msra.mxu0 0.0
    %611 = vmatprep.subr.mxu0 0.0
    %612 = vmatpush1.msra.mxu0 0.0
    %613 = vmatprep.subr.mxu0 0.0
    %614 = vmatpush1.msra.mxu0 0.0
    %615 = vmatprep.subr.mxu0 0.0
    %616 = vmatpush1.msra.mxu0 0.0
    %617 = vmatprep.subr.mxu0 0.0
    %618 = vmatpush1.msra.mxu0 0.0
    %619 = vmatprep.subr.mxu0 0.0
    %620 = vmatpush1.msra.mxu0 0.0
    %621 = vmatprep.subr.mxu0 0.0
    %622 = vmatpush1.msra.mxu0 0.0
    %623 = vmatprep.subr.mxu0 0.0
    %624 = vmatpush1.msra.mxu0 0.0
    %625 = vmatprep.subr.mxu0 0.0
    %626 = vmatpush1.msra.mxu0 0.0
    %627 = vmatprep.subr.mxu0 0.0
    %628 = vmatpush1.msra.mxu0 0.0
    %629 = vmatprep.subr.mxu0 0.0
    %630 = vmatpush1.msra.mxu0 0.0
    %631 = vmatprep.subr.mxu0 0.0
    %632 = vmatpush1.msra.mxu0 0.0
    %633 = vmatprep.subr.mxu0 0.0
    %634 = vmatpush1.msra.mxu0 0.0
    %635 = vmatprep.subr.mxu0 0.0
    %636 = vmatpush1.msra.mxu0 0.0
    %637 = vmatprep.subr.mxu0 0.0
    %638 = vmatpush1.msra.mxu0 0.0
    %639 = vmatprep.subr.mxu0 0.0
    %640 = vmatpush1.msra.mxu0 0.0
    %641 = vmatprep.subr.mxu0 0.0
    %642 = vmatpush1.msra.mxu0 0.0
    %643 = vmatprep.subr.mxu0 0.0
    %644 = vmatpush1.msra.mxu0 0.0
    %645 = vmatprep.subr.mxu0 0.0
    %646 = vmatpush1.msra.mxu0 0.0
    %647 = vmatprep.subr.mxu0 0.0
    %648 = vmatpush1.msra.mxu0 0.0
    %649 = vmatprep.subr.mxu0 0.0
    %650 = vmatpush1.msra.mxu0 0.0
    %651 = vmatprep.subr.mxu0 0.0
    %652 = vmatpush1.msra.mxu0 0.0
    %653 = vmatprep.subr.mxu0 0.0
    %654 = vmatpush1.msra.mxu0 0.0
    %655 = vmatprep.subr.mxu0 0.0
    %656 = vmatpush1.msra.mxu0 0.0
    %657 = vmatprep.subr.mxu0 0.0
    %658 = vmatpush1.msra.mxu0 0.0
    %659 = vmatprep.subr.mxu0 0.0
    %660 = vmatpush1.msra.mxu0 0.0
    %661 = vmatprep.mubr.f32.mxu0 0.0
    %662 = vmatmul.mubr.f32.gmra.mrb[0].mxu0 %v595
    %v663 = vpop.f32.mrb[0].mxu0
    %v664 = vadd.f32 %v322, %v663
    %v665 = vpop.f32.mrb[0].mxu0
    %666 = vdwg.mxu0
    %667 = vmatprep.subr.mxu0 0.0
    %668 = vmatpush1.msra.mxu0 %v115
    %669 = vmatprep.subr.mxu0 0.0
    %670 = vmatpush1.msra.mxu0 %v116
    %671 = vmatprep.subr.mxu0 0.0
    %672 = vmatpush1.msra.mxu0 %v117
    %673 = vmatprep.subr.mxu0 0.0
    %674 = vmatpush1.msra.mxu0 %v118
    %675 = vmatprep.subr.mxu0 0.0
    %676 = vmatpush1.msra.mxu0 0.0
    %677 = vmatprep.subr.mxu0 0.0
    %678 = vmatpush1.msra.mxu0 0.0
    %679 = vmatprep.subr.mxu0 0.0
    %680 = vmatpush1.msra.mxu0 0.0
    %681 = vmatprep.subr.mxu0 0.0
    %682 = vmatpush1.msra.mxu0 0.0
    %683 = vmatprep.subr.mxu0 0.0
    %684 = vmatpush1.msra.mxu0 0.0
    %685 = vmatprep.subr.mxu0 0.0
    %686 = vmatpush1.msra.mxu0 0.0
    %687 = vmatprep.subr.mxu0 0.0
    %688 = vmatpush1.msra.mxu0 0.0
    %689 = vmatprep.subr.mxu0 0.0
    %690 = vmatpush1.msra.mxu0 0.0
    %691 = vmatprep.subr.mxu0 0.0
    %692 = vmatpush1.msra.mxu0 0.0
    %693 = vmatprep.subr.mxu0 0.0
    %694 = vmatpush1.msra.mxu0 0.0
    %695 = vmatprep.subr.mxu0 0.0
    %696 = vmatpush1.msra.mxu0 0.0
    %697 = vmatprep.subr.mxu0 0.0
    %698 = vmatpush1.msra.mxu0 0.0
    %699 = vmatprep.subr.mxu0 0.0
    %700 = vmatpush1.msra.mxu0 0.0
    %701 = vmatprep.subr.mxu0 0.0
    %702 = vmatpush1.msra.mxu0 0.0
    %703 = vmatprep.subr.mxu0 0.0
    %704 = vmatpush1.msra.mxu0 0.0
    %705 = vmatprep.subr.mxu0 0.0
    %706 = vmatpush1.msra.mxu0 0.0
    %707 = vmatprep.subr.mxu0 0.0
    %708 = vmatpush1.msra.mxu0 0.0
    %709 = vmatprep.subr.mxu0 0.0
    %710 = vmatpush1.msra.mxu0 0.0
    %711 = vmatprep.subr.mxu0 0.0
    %712 = vmatpush1.msra.mxu0 0.0
    %713 = vmatprep.subr.mxu0 0.0
    %714 = vmatpush1.msra.mxu0 0.0
    %715 = vmatprep.subr.mxu0 0.0
    %716 = vmatpush1.msra.mxu0 0.0
    %717 = vmatprep.subr.mxu0 0.0
    %718 = vmatpush1.msra.mxu0 0.0
    %719 = vmatprep.subr.mxu0 0.0
    %720 = vmatpush1.msra.mxu0 0.0
    %721 = vmatprep.subr.mxu0 0.0
    %722 = vmatpush1.msra.mxu0 0.0
    %723 = vmatprep.subr.mxu0 0.0
    %724 = vmatpush1.msra.mxu0 0.0
    %725 = vmatprep.subr.mxu0 0.0
    %726 = vmatpush1.msra.mxu0 0.0
    %727 = vmatprep.subr.mxu0 0.0
    %728 = vmatpush1.msra.mxu0 0.0
    %729 = vmatprep.subr.mxu0 0.0
    %730 = vmatpush1.msra.mxu0 0.0
    %731 = vmatprep.mubr.f32.mxu0 0.0
    %732 = vmatmul.mubr.f32.gmra.mrb[0].mxu0 %v595
    %v733 = vpop.f32.mrb[0].mxu0
    %v734 = vadd.f32 0.0, %v733
    %v735 = vpop.f32.mrb[0].mxu0
    %736 = vdwg.mxu0
    %v738 = vrot.slane %v734, 4
    %v740 = vadd.f32 %v213, %v738
    %v741 = vmul.f32 %v740, 0.5
    %v742 = vtanh.pop %v741
    %v743 = vadd.f32 %v742, 1.0
    %v744 = vmul.f32 %v743, 0.5
    %v745 = vtanh.pop %v740
    %v747 = vrot.slane %v491, 6
    %v749 = vmul.f32 %v744, %v747
    %751 = vrot.lane.b32.xlu0 %v745, 64
    %v752 = vpop.permute.xlu0 %751
    %v754 = vmul.f32 %v744, %v752
    %756 = vrot.lane.b32.xlu0 %v754, 32
    %v757 = vpop.permute.xlu0 %756
    %v759 = vadd.f32 %v749, %v757
    %v760 = vtanh.pop %v759
    %762 = vrot.lane.b32.xlu0 %v760, 64
    %v763 = vpop.permute.xlu0 %762
    %v765 = vmul.f32 %v744, %v763
    %767 = vrot.lane.b32.xlu0 %v590, 32
    %v768 = vpop.permute.xlu0 %767
    %v769 = vsel %vm221, %v768, 0
    %771 = vmatprep.subr.mxu0 0.0
    %772 = vmatpush1.msra.mxu0 %v119
    %773 = vmatprep.subr.mxu0 0.0
    %774 = vmatpush1.msra.mxu0 %v120
    %775 = vmatprep.subr.mxu0 0.0
    %776 = vmatpush1.msra.mxu0 %v121
    %777 = vmatprep.subr.mxu0 0.0
    %778 = vmatpush1.msra.mxu0 %v122
    %779 = vmatprep.subr.mxu0 0.0
    %780 = vmatpush1.msra.mxu0 0.0
    %781 = vmatprep.subr.mxu0 0.0
    %782 = vmatpush1.msra.mxu0 0.0
    %783 = vmatprep.subr.mxu0 0.0
    %784 = vmatpush1.msra.mxu0 0.0
    %785 = vmatprep.subr.mxu0 0.0
    %786 = vmatpush1.msra.mxu0 0.0
    %787 = vmatprep.subr.mxu0 0.0
    %788 = vmatpush1.msra.mxu0 0.0
    %789 = vmatprep.subr.mxu0 0.0
    %790 = vmatpush1.msra.mxu0 0.0
    %791 = vmatprep.subr.mxu0 0.0
    %792 = vmatpush1.msra.mxu0 0.0
    %793 = vmatprep.subr.mxu0 0.0
    %794 = vmatpush1.msra.mxu0 0.0
    %795 = vmatprep.subr.mxu0 0.0
    %796 = vmatpush1.msra.mxu0 0.0
    %797 = vmatprep.subr.mxu0 0.0
    %798 = vmatpush1.msra.mxu0 0.0
    %799 = vmatprep.subr.mxu0 0.0
    %800 = vmatpush1.msra.mxu0 0.0
    %801 = vmatprep.subr.mxu0 0.0
    %802 = vmatpush1.msra.mxu0 0.0
    %803 = vmatprep.subr.mxu0 0.0
    %804 = vmatpush1.msra.mxu0 0.0
    %805 = vmatprep.subr.mxu0 0.0
    %806 = vmatpush1.msra.mxu0 0.0
    %807 = vmatprep.subr.mxu0 0.0
    %808 = vmatpush1.msra.mxu0 0.0
    %809 = vmatprep.subr.mxu0 0.0
    %810 = vmatpush1.msra.mxu0 0.0
    %811 = vmatprep.subr.mxu0 0.0
    %812 = vmatpush1.msra.mxu0 0.0
    %813 = vmatprep.subr.mxu0 0.0
    %814 = vmatpush1.msra.mxu0 0.0
    %815 = vmatprep.subr.mxu0 0.0
    %816 = vmatpush1.msra.mxu0 0.0
    %817 = vmatprep.subr.mxu0 0.0
    %818 = vmatpush1.msra.mxu0 0.0
    %819 = vmatprep.subr.mxu0 0.0
    %820 = vmatpush1.msra.mxu0 0.0
    %821 = vmatprep.subr.mxu0 0.0
    %822 = vmatpush1.msra.mxu0 0.0
    %823 = vmatprep.subr.mxu0 0.0
    %824 = vmatpush1.msra.mxu0 0.0
    %825 = vmatprep.subr.mxu0 0.0
    %826 = vmatpush1.msra.mxu0 0.0
    %827 = vmatprep.subr.mxu0 0.0
    %828 = vmatpush1.msra.mxu0 0.0
    %829 = vmatprep.subr.mxu0 0.0
    %830 = vmatpush1.msra.mxu0 0.0
    %831 = vmatprep.subr.mxu0 0.0
    %832 = vmatpush1.msra.mxu0 0.0
    %833 = vmatprep.subr.mxu0 0.0
    %834 = vmatpush1.msra.mxu0 0.0
    %835 = vmatprep.mubr.f32.mxu0 0.0
    %836 = vmatmul.mubr.f32.gmra.mrb[0].mxu0 %v769
    %v837 = vpop.f32.mrb[0].mxu0
    %v838 = vadd.f32 0.0, %v837
    %v839 = vpop.f32.mrb[0].mxu0
    %840 = vdwg.mxu0
    %v841 = vadd.f32 %v664, %v838
    %v842 = vmul.f32 %v841, 0.5
    %v843 = vtanh.pop %v842
    %v844 = vadd.f32 %v843, 1.0
    %v845 = vmul.f32 %v844, 0.5
    %v846 = vtanh.pop %v841
    %v847 = vmul.f32 %v845, %v584
    %849 = vrot.lane.b32.xlu0 %v846, 64
    %v850 = vpop.permute.xlu0 %849
    %v852 = vmul.f32 %v845, %v850
    %854 = vrot.lane.b32.xlu0 %v852, 32
    %v855 = vpop.permute.xlu0 %854
    %v857 = vadd.f32 %v847, %v855
    %v858 = vtanh.pop %v857
    %860 = vrot.lane.b32.xlu0 %v858, 64
    %v861 = vpop.permute.xlu0 %860
    %v863 = vmul.f32 %v845, %v861
    %v865 = vrot.slane %v765, 4
    %866 = vrot.lane.b32.xlu0 %v865, 32
    %v867 = vpop.permute.xlu0 %866
    %v868 = vsel %vm221, %v867, 0
    %870 = vmatprep.subr.mxu0 0.0
    %871 = vmatpush1.msra.mxu0 %v123
    %872 = vmatprep.subr.mxu0 0.0
    %873 = vmatpush1.msra.mxu0 %v124
    %874 = vmatprep.subr.mxu0 0.0
    %875 = vmatpush1.msra.mxu0 %v125
    %876 = vmatprep.subr.mxu0 0.0
    %877 = vmatpush1.msra.mxu0 %v126
    %878 = vmatprep.subr.mxu0 0.0
    %879 = vmatpush1.msra.mxu0 0.0
    %880 = vmatprep.subr.mxu0 0.0
    %881 = vmatpush1.msra.mxu0 0.0
    %882 = vmatprep.subr.mxu0 0.0
    %883 = vmatpush1.msra.mxu0 0.0
    %884 = vmatprep.subr.mxu0 0.0
    %885 = vmatpush1.msra.mxu0 0.0
    %886 = vmatprep.subr.mxu0 0.0
    %887 = vmatpush1.msra.mxu0 0.0
    %888 = vmatprep.subr.mxu0 0.0
    %889 = vmatpush1.msra.mxu0 0.0
    %890 = vmatprep.subr.mxu0 0.0
    %891 = vmatpush1.msra.mxu0 0.0
    %892 = vmatprep.subr.mxu0 0.0
    %893 = vmatpush1.msra.mxu0 0.0
    %894 = vmatprep.subr.mxu0 0.0
    %895 = vmatpush1.msra.mxu0 0.0
    %896 = vmatprep.subr.mxu0 0.0
    %897 = vmatpush1.msra.mxu0 0.0
    %898 = vmatprep.subr.mxu0 0.0
    %899 = vmatpush1.msra.mxu0 0.0
    %900 = vmatprep.subr.mxu0 0.0
    %901 = vmatpush1.msra.mxu0 0.0
    %902 = vmatprep.subr.mxu0 0.0
    %903 = vmatpush1.msra.mxu0 0.0
    %904 = vmatprep.subr.mxu0 0.0
    %905 = vmatpush1.msra.mxu0 0.0
    %906 = vmatprep.subr.mxu0 0.0
    %907 = vmatpush1.msra.mxu0 0.0
    %908 = vmatprep.subr.mxu0 0.0
    %909 = vmatpush1.msra.mxu0 0.0
    %910 = vmatprep.subr.mxu0 0.0
    %911 = vmatpush1.msra.mxu0 0.0
    %912 = vmatprep.subr.mxu0 0.0
    %913 = vmatpush1.msra.mxu0 0.0
    %914 = vmatprep.subr.mxu0 0.0
    %915 = vmatpush1.msra.mxu0 0.0
    %916 = vmatprep.subr.mxu0 0.0
    %917 = vmatpush1.msra.mxu0 0.0
    %918 = vmatprep.subr.mxu0 0.0
    %919 = vmatpush1.msra.mxu0 0.0
    %920 = vmatprep.subr.mxu0 0.0
    %921 = vmatpush1.msra.mxu0 0.0
    %922 = vmatprep.subr.mxu0 0.0
    %923 = vmatpush1.msra.mxu0 0.0
    %924 = vmatprep.subr.mxu0 0.0
    %925 = vmatpush1.msra.mxu0 0.0
    %926 = vmatprep.subr.mxu0 0.0
    %927 = vmatpush1.msra.mxu0 0.0
    %928 = vmatprep.subr.mxu0 0.0
    %929 = vmatpush1.msra.mxu0 0.0
    %930 = vmatprep.subr.mxu0 0.0
    %931 = vmatpush1.msra.mxu0 0.0
    %932 = vmatprep.subr.mxu0 0.0
    %933 = vmatpush1.msra.mxu0 0.0
    %934 = vmatprep.mubr.f32.mxu0 0.0
    %935 = vmatmul.mubr.f32.gmra.mrb[0].mxu0 %v868
    %v936 = vpop.f32.mrb[0].mxu0
    %v937 = vadd.f32 %v322, %v936
    %v938 = vpop.f32.mrb[0].mxu0
    %939 = vdwg.mxu0
    %940 = vmatprep.subr.mxu0 0.0
    %941 = vmatpush1.msra.mxu0 %v115
    %942 = vmatprep.subr.mxu0 0.0
    %943 = vmatpush1.msra.mxu0 %v116
    %944 = vmatprep.subr.mxu0 0.0
    %945 = vmatpush1.msra.mxu0 %v117
    %946 = vmatprep.subr.mxu0 0.0
    %947 = vmatpush1.msra.mxu0 %v118
    %948 = vmatprep.subr.mxu0 0.0
    %949 = vmatpush1.msra.mxu0 0.0
    %950 = vmatprep.subr.mxu0 0.0
    %951 = vmatpush1.msra.mxu0 0.0
    %952 = vmatprep.subr.mxu0 0.0
    %953 = vmatpush1.msra.mxu0 0.0
    %954 = vmatprep.subr.mxu0 0.0
    %955 = vmatpush1.msra.mxu0 0.0
    %956 = vmatprep.subr.mxu0 0.0
    %957 = vmatpush1.msra.mxu0 0.0
    %958 = vmatprep.subr.mxu0 0.0
    %959 = vmatpush1.msra.mxu0 0.0
    %960 = vmatprep.subr.mxu0 0.0
    %961 = vmatpush1.msra.mxu0 0.0
    %962 = vmatprep.subr.mxu0 0.0
    %963 = vmatpush1.msra.mxu0 0.0
    %964 = vmatprep.subr.mxu0 0.0
    %965 = vmatpush1.msra.mxu0 0.0
    %966 = vmatprep.subr.mxu0 0.0
    %967 = vmatpush1.msra.mxu0 0.0
    %968 = vmatprep.subr.mxu0 0.0
    %969 = vmatpush1.msra.mxu0 0.0
    %970 = vmatprep.subr.mxu0 0.0
    %971 = vmatpush1.msra.mxu0 0.0
    %972 = vmatprep.subr.mxu0 0.0
    %973 = vmatpush1.msra.mxu0 0.0
    %974 = vmatprep.subr.mxu0 0.0
    %975 = vmatpush1.msra.mxu0 0.0
    %976 = vmatprep.subr.mxu0 0.0
    %977 = vmatpush1.msra.mxu0 0.0
    %978 = vmatprep.subr.mxu0 0.0
    %979 = vmatpush1.msra.mxu0 0.0
    %980 = vmatprep.subr.mxu0 0.0
    %981 = vmatpush1.msra.mxu0 0.0
    %982 = vmatprep.subr.mxu0 0.0
    %983 = vmatpush1.msra.mxu0 0.0
    %984 = vmatprep.subr.mxu0 0.0
    %985 = vmatpush1.msra.mxu0 0.0
    %986 = vmatprep.subr.mxu0 0.0
    %987 = vmatpush1.msra.mxu0 0.0
    %988 = vmatprep.subr.mxu0 0.0
    %989 = vmatpush1.msra.mxu0 0.0
    %990 = vmatprep.subr.mxu0 0.0
    %991 = vmatpush1.msra.mxu0 0.0
    %992 = vmatprep.subr.mxu0 0.0
    %993 = vmatpush1.msra.mxu0 0.0
    %994 = vmatprep.subr.mxu0 0.0
    %995 = vmatpush1.msra.mxu0 0.0
    %996 = vmatprep.subr.mxu0 0.0
    %997 = vmatpush1.msra.mxu0 0.0
    %998 = vmatprep.subr.mxu0 0.0
    %999 = vmatpush1.msra.mxu0 0.0
    %1000 = vmatprep.subr.mxu0 0.0
    %1001 = vmatpush1.msra.mxu0 0.0
    %1002 = vmatprep.subr.mxu0 0.0
    %1003 = vmatpush1.msra.mxu0 0.0
    %1004 = vmatprep.mubr.f32.mxu0 0.0
    %1005 = vmatmul.mubr.f32.gmra.mrb[0].mxu0 %v868
    %v1006 = vpop.f32.mrb[0].mxu0
    %v1007 = vadd.f32 0.0, %v1006
    %v1008 = vpop.f32.mrb[0].mxu0
    %1009 = vdwg.mxu0
    %v1011 = vrot.slane %v1007, 2
    %v1013 = vadd.f32 %v213, %v1011
    %v1014 = vmul.f32 %v1013, 0.5
    %v1015 = vtanh.pop %v1014
    %v1016 = vadd.f32 %v1015, 1.0
    %v1017 = vmul.f32 %v1016, 0.5
    %v1018 = vtanh.pop %v1013
    %v1020 = vrot.slane %v759, 6
    %v1022 = vmul.f32 %v1017, %v1020
    %1024 = vrot.lane.b32.xlu0 %v1018, 64
    %v1025 = vpop.permute.xlu0 %1024
    %v1027 = vmul.f32 %v1017, %v1025
    %1029 = vrot.lane.b32.xlu0 %v1027, 32
    %v1030 = vpop.permute.xlu0 %1029
    %v1032 = vadd.f32 %v1022, %v1030
    %v1033 = vtanh.pop %v1032
    %1035 = vrot.lane.b32.xlu0 %v1033, 64
    %v1036 = vpop.permute.xlu0 %1035
    %v1038 = vmul.f32 %v1017, %v1036
    %1040 = vrot.lane.b32.xlu0 %v863, 32
    %v1041 = vpop.permute.xlu0 %1040
    %v1042 = vsel %vm221, %v1041, 0
    %1044 = vmatprep.subr.mxu0 0.0
    %1045 = vmatpush1.msra.mxu0 %v119
    %1046 = vmatprep.subr.mxu0 0.0
    %1047 = vmatpush1.msra.mxu0 %v120
    %1048 = vmatprep.subr.mxu0 0.0
    %1049 = vmatpush1.msra.mxu0 %v121
    %1050 = vmatprep.subr.mxu0 0.0
    %1051 = vmatpush1.msra.mxu0 %v122
    %1052 = vmatprep.subr.mxu0 0.0
    %1053 = vmatpush1.msra.mxu0 0.0
    %1054 = vmatprep.subr.mxu0 0.0
    %1055 = vmatpush1.msra.mxu0 0.0
    %1056 = vmatprep.subr.mxu0 0.0
    %1057 = vmatpush1.msra.mxu0 0.0
    %1058 = vmatprep.subr.mxu0 0.0
    %1059 = vmatpush1.msra.mxu0 0.0
    %1060 = vmatprep.subr.mxu0 0.0
    %1061 = vmatpush1.msra.mxu0 0.0
    %1062 = vmatprep.subr.mxu0 0.0
    %1063 = vmatpush1.msra.mxu0 0.0
    %1064 = vmatprep.subr.mxu0 0.0
    %1065 = vmatpush1.msra.mxu0 0.0
    %1066 = vmatprep.subr.mxu0 0.0
    %1067 = vmatpush1.msra.mxu0 0.0
    %1068 = vmatprep.subr.mxu0 0.0
    %1069 = vmatpush1.msra.mxu0 0.0
    %1070 = vmatprep.subr.mxu0 0.0
    %1071 = vmatpush1.msra.mxu0 0.0
    %1072 = vmatprep.subr.mxu0 0.0
    %1073 = vmatpush1.msra.mxu0 0.0
    %1074 = vmatprep.subr.mxu0 0.0
    %1075 = vmatpush1.msra.mxu0 0.0
    %1076 = vmatprep.subr.mxu0 0.0
    %1077 = vmatpush1.msra.mxu0 0.0
    %1078 = vmatprep.subr.mxu0 0.0
    %1079 = vmatpush1.msra.mxu0 0.0
    %1080 = vmatprep.subr.mxu0 0.0
    %1081 = vmatpush1.msra.mxu0 0.0
    %1082 = vmatprep.subr.mxu0 0.0
    %1083 = vmatpush1.msra.mxu0 0.0
    %1084 = vmatprep.subr.mxu0 0.0
    %1085 = vmatpush1.msra.mxu0 0.0
    %1086 = vmatprep.subr.mxu0 0.0
    %1087 = vmatpush1.msra.mxu0 0.0
    %1088 = vmatprep.subr.mxu0 0.0
    %1089 = vmatpush1.msra.mxu0 0.0
    %1090 = vmatprep.subr.mxu0 0.0
    %1091 = vmatpush1.msra.mxu0 0.0
    %1092 = vmatprep.subr.mxu0 0.0
    %1093 = vmatpush1.msra.mxu0 0.0
    %1094 = vmatprep.subr.mxu0 0.0
    %1095 = vmatpush1.msra.mxu0 0.0
    %1096 = vmatprep.subr.mxu0 0.0
    %1097 = vmatpush1.msra.mxu0 0.0
    %1098 = vmatprep.subr.mxu0 0.0
    %1099 = vmatpush1.msra.mxu0 0.0
    %1100 = vmatprep.subr.mxu0 0.0
    %1101 = vmatpush1.msra.mxu0 0.0
    %1102 = vmatprep.subr.mxu0 0.0
    %1103 = vmatpush1.msra.mxu0 0.0
    %1104 = vmatprep.subr.mxu0 0.0
    %1105 = vmatpush1.msra.mxu0 0.0
    %1106 = vmatprep.subr.mxu0 0.0
    %1107 = vmatpush1.msra.mxu0 0.0
    %1108 = vmatprep.mubr.f32.mxu0 0.0
    %1109 = vmatmul.mubr.f32.gmra.mrb[0].mxu0 %v1042
    %v1110 = vpop.f32.mrb[0].mxu0
    %v1111 = vadd.f32 0.0, %v1110
    %v1112 = vpop.f32.mrb[0].mxu0
    %1113 = vdwg.mxu0
    %v1114 = vadd.f32 %v937, %v1111
    %v1115 = vmul.f32 %v1114, 0.5
    %v1116 = vtanh.pop %v1115
    %v1117 = vadd.f32 %v1116, 1.0
    %v1118 = vmul.f32 %v1117, 0.5
    %v1119 = vtanh.pop %v1114
    %v1120 = vmul.f32 %v1118, %v857
    %1122 = vrot.lane.b32.xlu0 %v1119, 64
    %v1123 = vpop.permute.xlu0 %1122
    %v1125 = vmul.f32 %v1118, %v1123
    %1127 = vrot.lane.b32.xlu0 %v1125, 32
    %v1128 = vpop.permute.xlu0 %1127
    %v1130 = vadd.f32 %v1120, %v1128
    %v1131 = vtanh.pop %v1130
    %1133 = vrot.lane.b32.xlu0 %v1131, 64
    %v1134 = vpop.permute.xlu0 %1133
    %v1136 = vmul.f32 %v1118, %v1134
    %v1138 = vrot.slane %v1038, 6
    %1139 = vrot.lane.b32.xlu0 %v1138, 32
    %v1140 = vpop.permute.xlu0 %1139
    %v1141 = vsel %vm221, %v1140, 0
    %1143 = vmatprep.subr.mxu0 0.0
    %1144 = vmatpush1.msra.mxu0 %v123
    %1145 = vmatprep.subr.mxu0 0.0
    %1146 = vmatpush1.msra.mxu0 %v124
    %1147 = vmatprep.subr.mxu0 0.0
    %1148 = vmatpush1.msra.mxu0 %v125
    %1149 = vmatprep.subr.mxu0 0.0
    %1150 = vmatpush1.msra.mxu0 %v126
    %1151 = vmatprep.subr.mxu0 0.0
    %1152 = vmatpush1.msra.mxu0 0.0
    %1153 = vmatprep.subr.mxu0 0.0
    %1154 = vmatpush1.msra.mxu0 0.0
    %1155 = vmatprep.subr.mxu0 0.0
    %1156 = vmatpush1.msra.mxu0 0.0
    %1157 = vmatprep.subr.mxu0 0.0
    %1158 = vmatpush1.msra.mxu0 0.0
    %1159 = vmatprep.subr.mxu0 0.0
    %1160 = vmatpush1.msra.mxu0 0.0
    %1161 = vmatprep.subr.mxu0 0.0
    %1162 = vmatpush1.msra.mxu0 0.0
    %1163 = vmatprep.subr.mxu0 0.0
    %1164 = vmatpush1.msra.mxu0 0.0
    %1165 = vmatprep.subr.mxu0 0.0
    %1166 = vmatpush1.msra.mxu0 0.0
    %1167 = vmatprep.subr.mxu0 0.0
    %1168 = vmatpush1.msra.mxu0 0.0
    %1169 = vmatprep.subr.mxu0 0.0
    %1170 = vmatpush1.msra.mxu0 0.0
    %1171 = vmatprep.subr.mxu0 0.0
    %1172 = vmatpush1.msra.mxu0 0.0
    %1173 = vmatprep.subr.mxu0 0.0
    %1174 = vmatpush1.msra.mxu0 0.0
    %1175 = vmatprep.subr.mxu0 0.0
    %1176 = vmatpush1.msra.mxu0 0.0
    %1177 = vmatprep.subr.mxu0 0.0
    %1178 = vmatpush1.msra.mxu0 0.0
    %1179 = vmatprep.subr.mxu0 0.0
    %1180 = vmatpush1.msra.mxu0 0.0
    %1181 = vmatprep.subr.mxu0 0.0
    %1182 = vmatpush1.msra.mxu0 0.0
    %1183 = vmatprep.subr.mxu0 0.0
    %1184 = vmatpush1.msra.mxu0 0.0
    %1185 = vmatprep.subr.mxu0 0.0
    %1186 = vmatpush1.msra.mxu0 0.0
    %1187 = vmatprep.subr.mxu0 0.0
    %1188 = vmatpush1.msra.mxu0 0.0
    %1189 = vmatprep.subr.mxu0 0.0
    %1190 = vmatpush1.msra.mxu0 0.0
    %1191 = vmatprep.subr.mxu0 0.0
    %1192 = vmatpush1.msra.mxu0 0.0
    %1193 = vmatprep.subr.mxu0 0.0
    %1194 = vmatpush1.msra.mxu0 0.0
    %1195 = vmatprep.subr.mxu0 0.0
    %1196 = vmatpush1.msra.mxu0 0.0
    %1197 = vmatprep.subr.mxu0 0.0
    %1198 = vmatpush1.msra.mxu0 0.0
    %1199 = vmatprep.subr.mxu0 0.0
    %1200 = vmatpush1.msra.mxu0 0.0
    %1201 = vmatprep.subr.mxu0 0.0
    %1202 = vmatpush1.msra.mxu0 0.0
    %1203 = vmatprep.subr.mxu0 0.0
    %1204 = vmatpush1.msra.mxu0 0.0
    %1205 = vmatprep.subr.mxu0 0.0
    %1206 = vmatpush1.msra.mxu0 0.0
    %1207 = vmatprep.mubr.f32.mxu0 0.0
    %1208 = vmatmul.mubr.f32.gmra.mrb[0].mxu0 %v1141
    %v1209 = vpop.f32.mrb[0].mxu0
    %v1210 = vadd.f32 %v322, %v1209
    %v1211 = vpop.f32.mrb[0].mxu0
    %1212 = vdwg.mxu0
    %1213 = vmatprep.subr.mxu0 0.0
    %1214 = vmatpush1.msra.mxu0 %v115
    %1215 = vmatprep.subr.mxu0 0.0
    %1216 = vmatpush1.msra.mxu0 %v116
    %1217 = vmatprep.subr.mxu0 0.0
    %1218 = vmatpush1.msra.mxu0 %v117
    %1219 = vmatprep.subr.mxu0 0.0
    %1220 = vmatpush1.msra.mxu0 %v118
    %1221 = vmatprep.subr.mxu0 0.0
    %1222 = vmatpush1.msra.mxu0 0.0
    %1223 = vmatprep.subr.mxu0 0.0
    %1224 = vmatpush1.msra.mxu0 0.0
    %1225 = vmatprep.subr.mxu0 0.0
    %1226 = vmatpush1.msra.mxu0 0.0
    %1227 = vmatprep.subr.mxu0 0.0
    %1228 = vmatpush1.msra.mxu0 0.0
    %1229 = vmatprep.subr.mxu0 0.0
    %1230 = vmatpush1.msra.mxu0 0.0
    %1231 = vmatprep.subr.mxu0 0.0
    %1232 = vmatpush1.msra.mxu0 0.0
    %1233 = vmatprep.subr.mxu0 0.0
    %1234 = vmatpush1.msra.mxu0 0.0
    %1235 = vmatprep.subr.mxu0 0.0
    %1236 = vmatpush1.msra.mxu0 0.0
    %1237 = vmatprep.subr.mxu0 0.0
    %1238 = vmatpush1.msra.mxu0 0.0
    %1239 = vmatprep.subr.mxu0 0.0
    %1240 = vmatpush1.msra.mxu0 0.0
    %1241 = vmatprep.subr.mxu0 0.0
    %1242 = vmatpush1.msra.mxu0 0.0
    %1243 = vmatprep.subr.mxu0 0.0
    %1244 = vmatpush1.msra.mxu0 0.0
    %1245 = vmatprep.subr.mxu0 0.0
    %1246 = vmatpush1.msra.mxu0 0.0
    %1247 = vmatprep.subr.mxu0 0.0
    %1248 = vmatpush1.msra.mxu0 0.0
    %1249 = vmatprep.subr.mxu0 0.0
    %1250 = vmatpush1.msra.mxu0 0.0
    %1251 = vmatprep.subr.mxu0 0.0
    %1252 = vmatpush1.msra.mxu0 0.0
    %1253 = vmatprep.subr.mxu0 0.0
    %1254 = vmatpush1.msra.mxu0 0.0
    %1255 = vmatprep.subr.mxu0 0.0
    %1256 = vmatpush1.msra.mxu0 0.0
    %1257 = vmatprep.subr.mxu0 0.0
    %1258 = vmatpush1.msra.mxu0 0.0
    %1259 = vmatprep.subr.mxu0 0.0
    %1260 = vmatpush1.msra.mxu0 0.0
    %1261 = vmatprep.subr.mxu0 0.0
    %1262 = vmatpush1.msra.mxu0 0.0
    %1263 = vmatprep.subr.mxu0 0.0
    %1264 = vmatpush1.msra.mxu0 0.0
    %1265 = vmatprep.subr.mxu0 0.0
    %1266 = vmatpush1.msra.mxu0 0.0
    %1267 = vmatprep.subr.mxu0 0.0
    %1268 = vmatpush1.msra.mxu0 0.0
    %1269 = vmatprep.subr.mxu0 0.0
    %1270 = vmatpush1.msra.mxu0 0.0
    %1271 = vmatprep.subr.mxu0 0.0
    %1272 = vmatpush1.msra.mxu0 0.0
    %1273 = vmatprep.subr.mxu0 0.0
    %1274 = vmatpush1.msra.mxu0 0.0
    %1275 = vmatprep.subr.mxu0 0.0
    %1276 = vmatpush1.msra.mxu0 0.0
    %1277 = vmatprep.mubr.f32.mxu0 0.0
    %1278 = vmatmul.mubr.f32.gmra.mrb[0].mxu0 %v1141
    %v1279 = vpop.f32.mrb[0].mxu0
    %v1280 = vadd.f32 0.0, %v1279
    %v1281 = vpop.f32.mrb[0].mxu0
    %1282 = vdwg.mxu0
    %v1283 = vadd.f32 %v218, %v1280
    %v1284 = vmul.f32 %v1283, 0.5
    %v1285 = vtanh.pop %v1284
    %v1286 = vadd.f32 %v1285, 1.0
    %v1287 = vmul.f32 %v1286, 0.5
    %v1288 = vtanh.pop %v1283
    %v1290 = vrot.slane %v1032, 6
    %v1292 = vmul.f32 %v1287, %v1290
    %1294 = vrot.lane.b32.xlu0 %v1288, 64
    %v1295 = vpop.permute.xlu0 %1294
    %v1297 = vmul.f32 %v1287, %v1295
    %1299 = vrot.lane.b32.xlu0 %v1297, 32
    %v1300 = vpop.permute.xlu0 %1299
    %v1302 = vadd.f32 %v1292, %v1300
    %v1303 = vtanh.pop %v1302
    %1305 = vrot.lane.b32.xlu0 %v1303, 64
    %v1306 = vpop.permute.xlu0 %1305
    %v1308 = vmul.f32 %v1287, %v1306
    %1310 = vrot.lane.b32.xlu0 %v1136, 32
    %v1311 = vpop.permute.xlu0 %1310
    %v1312 = vsel %vm221, %v1311, 0
    %1314 = vmatprep.subr.mxu0 0.0
    %1315 = vmatpush1.msra.mxu0 %v119
    %1316 = vmatprep.subr.mxu0 0.0
    %1317 = vmatpush1.msra.mxu0 %v120
    %1318 = vmatprep.subr.mxu0 0.0
    %1319 = vmatpush1.msra.mxu0 %v121
    %1320 = vmatprep.subr.mxu0 0.0
    %1321 = vmatpush1.msra.mxu0 %v122
    %1322 = vmatprep.subr.mxu0 0.0
    %1323 = vmatpush1.msra.mxu0 0.0
    %1324 = vmatprep.subr.mxu0 0.0
    %1325 = vmatpush1.msra.mxu0 0.0
    %1326 = vmatprep.subr.mxu0 0.0
    %1327 = vmatpush1.msra.mxu0 0.0
    %1328 = vmatprep.subr.mxu0 0.0
    %1329 = vmatpush1.msra.mxu0 0.0
    %1330 = vmatprep.subr.mxu0 0.0
    %1331 = vmatpush1.msra.mxu0 0.0
    %1332 = vmatprep.subr.mxu0 0.0
    %1333 = vmatpush1.msra.mxu0 0.0
    %1334 = vmatprep.subr.mxu0 0.0
    %1335 = vmatpush1.msra.mxu0 0.0
    %1336 = vmatprep.subr.mxu0 0.0
    %1337 = vmatpush1.msra.mxu0 0.0
    %1338 = vmatprep.subr.mxu0 0.0
    %1339 = vmatpush1.msra.mxu0 0.0
    %1340 = vmatprep.subr.mxu0 0.0
    %1341 = vmatpush1.msra.mxu0 0.0
    %1342 = vmatprep.subr.mxu0 0.0
    %1343 = vmatpush1.msra.mxu0 0.0
    %1344 = vmatprep.subr.mxu0 0.0
    %1345 = vmatpush1.msra.mxu0 0.0
    %1346 = vmatprep.subr.mxu0 0.0
    %1347 = vmatpush1.msra.mxu0 0.0
    %1348 = vmatprep.subr.mxu0 0.0
    %1349 = vmatpush1.msra.mxu0 0.0
    %1350 = vmatprep.subr.mxu0 0.0
    %1351 = vmatpush1.msra.mxu0 0.0
    %1352 = vmatprep.subr.mxu0 0.0
    %1353 = vmatpush1.msra.mxu0 0.0
    %1354 = vmatprep.subr.mxu0 0.0
    %1355 = vmatpush1.msra.mxu0 0.0
    %1356 = vmatprep.subr.mxu0 0.0
    %1357 = vmatpush1.msra.mxu0 0.0
    %1358 = vmatprep.subr.mxu0 0.0
    %1359 = vmatpush1.msra.mxu0 0.0
    %1360 = vmatprep.subr.mxu0 0.0
    %1361 = vmatpush1.msra.mxu0 0.0
    %1362 = vmatprep.subr.mxu0 0.0
    %1363 = vmatpush1.msra.mxu0 0.0
    %1364 = vmatprep.subr.mxu0 0.0
    %1365 = vmatpush1.msra.mxu0 0.0
    %1366 = vmatprep.subr.mxu0 0.0
    %1367 = vmatpush1.msra.mxu0 0.0
    %1368 = vmatprep.subr.mxu0 0.0
    %1369 = vmatpush1.msra.mxu0 0.0
    %1370 = vmatprep.subr.mxu0 0.0
    %1371 = vmatpush1.msra.mxu0 0.0
    %1372 = vmatprep.subr.mxu0 0.0
    %1373 = vmatpush1.msra.mxu0 0.0
    %1374 = vmatprep.subr.mxu0 0.0
    %1375 = vmatpush1.msra.mxu0 0.0
    %1376 = vmatprep.subr.mxu0 0.0
    %1377 = vmatpush1.msra.mxu0 0.0
    %1378 = vmatprep.mubr.f32.mxu0 0.0
    %1379 = vmatmul.mubr.f32.gmra.mrb[0].mxu0 %v1312
    %v1380 = vpop.f32.mrb[0].mxu0
    %v1381 = vadd.f32 0.0, %v1380
    %v1382 = vpop.f32.mrb[0].mxu0
    %1383 = vdwg.mxu0
    %v1384 = vadd.f32 %v1210, %v1381
    %v1385 = vmul.f32 %v1384, 0.5
    %v1386 = vtanh.pop %v1385
    %v1387 = vadd.f32 %v1386, 1.0
    %v1388 = vmul.f32 %v1387, 0.5
    %v1389 = vtanh.pop %v1384
    %v1390 = vmul.f32 %v1388, %v1130
    %1392 = vrot.lane.b32.xlu0 %v1389, 64
    %v1393 = vpop.permute.xlu0 %1392
    %v1395 = vmul.f32 %v1388, %v1393
    %1397 = vrot.lane.b32.xlu0 %v1395, 32
    %v1398 = vpop.permute.xlu0 %1397
    %v1400 = vadd.f32 %v1390, %v1398
    %v1401 = vtanh.pop %v1400
    %1403 = vrot.lane.b32.xlu0 %v1401, 64
    %v1404 = vpop.permute.xlu0 %1403
    %v1406 = vmul.f32 %v1388, %v1404
    %1408 = vrot.lane.b32.xlu0 %v1308, 32
    %v1409 = vpop.permute.xlu0 %1408
    %v1410 = vsel %vm221, %v1409, 0
    %1412 = vmatprep.subr.mxu0 0.0
    %1413 = vmatpush1.msra.mxu0 %v123
    %1414 = vmatprep.subr.mxu0 0.0
    %1415 = vmatpush1.msra.mxu0 %v124
    %1416 = vmatprep.subr.mxu0 0.0
    %1417 = vmatpush1.msra.mxu0 %v125
    %1418 = vmatprep.subr.mxu0 0.0
    %1419 = vmatpush1.msra.mxu0 %v126
    %1420 = vmatprep.subr.mxu0 0.0
    %1421 = vmatpush1.msra.mxu0 0.0
    %1422 = vmatprep.subr.mxu0 0.0
    %1423 = vmatpush1.msra.mxu0 0.0
    %1424 = vmatprep.subr.mxu0 0.0
    %1425 = vmatpush1.msra.mxu0 0.0
    %1426 = vmatprep.subr.mxu0 0.0
    %1427 = vmatpush1.msra.mxu0 0.0
    %1428 = vmatprep.subr.mxu0 0.0
    %1429 = vmatpush1.msra.mxu0 0.0
    %1430 = vmatprep.subr.mxu0 0.0
    %1431 = vmatpush1.msra.mxu0 0.0
    %1432 = vmatprep.subr.mxu0 0.0
    %1433 = vmatpush1.msra.mxu0 0.0
    %1434 = vmatprep.subr.mxu0 0.0
    %1435 = vmatpush1.msra.mxu0 0.0
    %1436 = vmatprep.subr.mxu0 0.0
    %1437 = vmatpush1.msra.mxu0 0.0
    %1438 = vmatprep.subr.mxu0 0.0
    %1439 = vmatpush1.msra.mxu0 0.0
    %1440 = vmatprep.subr.mxu0 0.0
    %1441 = vmatpush1.msra.mxu0 0.0
    %1442 = vmatprep.subr.mxu0 0.0
    %1443 = vmatpush1.msra.mxu0 0.0
    %1444 = vmatprep.subr.mxu0 0.0
    %1445 = vmatpush1.msra.mxu0 0.0
    %1446 = vmatprep.subr.mxu0 0.0
    %1447 = vmatpush1.msra.mxu0 0.0
    %1448 = vmatprep.subr.mxu0 0.0
    %1449 = vmatpush1.msra.mxu0 0.0
    %1450 = vmatprep.subr.mxu0 0.0
    %1451 = vmatpush1.msra.mxu0 0.0
    %1452 = vmatprep.subr.mxu0 0.0
    %1453 = vmatpush1.msra.mxu0 0.0
    %1454 = vmatprep.subr.mxu0 0.0
    %1455 = vmatpush1.msra.mxu0 0.0
    %1456 = vmatprep.subr.mxu0 0.0
    %1457 = vmatpush1.msra.mxu0 0.0
    %1458 = vmatprep.subr.mxu0 0.0
    %1459 = vmatpush1.msra.mxu0 0.0
    %1460 = vmatprep.subr.mxu0 0.0
    %1461 = vmatpush1.msra.mxu0 0.0
    %1462 = vmatprep.subr.mxu0 0.0
    %1463 = vmatpush1.msra.mxu0 0.0
    %1464 = vmatprep.subr.mxu0 0.0
    %1465 = vmatpush1.msra.mxu0 0.0
    %1466 = vmatprep.subr.mxu0 0.0
    %1467 = vmatpush1.msra.mxu0 0.0
    %1468 = vmatprep.subr.mxu0 0.0
    %1469 = vmatpush1.msra.mxu0 0.0
    %1470 = vmatprep.subr.mxu0 0.0
    %1471 = vmatpush1.msra.mxu0 0.0
    %1472 = vmatprep.subr.mxu0 0.0
    %1473 = vmatpush1.msra.mxu0 0.0
    %1474 = vmatprep.subr.mxu0 0.0
    %1475 = vmatpush1.msra.mxu0 0.0
    %1476 = vmatprep.mubr.f32.mxu0 0.0
    %1477 = vmatmul.mubr.f32.gmra.mrb[0].mxu0 %v1410
    %v1478 = vpop.f32.mrb[0].mxu0
    %v1479 = vadd.f32 %v322, %v1478
    %v1480 = vpop.f32.mrb[0].mxu0
    %1481 = vdwg.mxu0
    %1482 = vmatprep.subr.mxu0 0.0
    %1483 = vmatpush1.msra.mxu0 %v115
    %1484 = vmatprep.subr.mxu0 0.0
    %1485 = vmatpush1.msra.mxu0 %v116
    %1486 = vmatprep.subr.mxu0 0.0
    %1487 = vmatpush1.msra.mxu0 %v117
    %1488 = vmatprep.subr.mxu0 0.0
    %1489 = vmatpush1.msra.mxu0 %v118
    %1490 = vmatprep.subr.mxu0 0.0
    %1491 = vmatpush1.msra.mxu0 0.0
    %1492 = vmatprep.subr.mxu0 0.0
    %1493 = vmatpush1.msra.mxu0 0.0
    %1494 = vmatprep.subr.mxu0 0.0
    %1495 = vmatpush1.msra.mxu0 0.0
    %1496 = vmatprep.subr.mxu0 0.0
    %1497 = vmatpush1.msra.mxu0 0.0
    %1498 = vmatprep.subr.mxu0 0.0
    %1499 = vmatpush1.msra.mxu0 0.0
    %1500 = vmatprep.subr.mxu0 0.0
    %1501 = vmatpush1.msra.mxu0 0.0
    %1502 = vmatprep.subr.mxu0 0.0
    %1503 = vmatpush1.msra.mxu0 0.0
    %1504 = vmatprep.subr.mxu0 0.0
    %1505 = vmatpush1.msra.mxu0 0.0
    %1506 = vmatprep.subr.mxu0 0.0
    %1507 = vmatpush1.msra.mxu0 0.0
    %1508 = vmatprep.subr.mxu0 0.0
    %1509 = vmatpush1.msra.mxu0 0.0
    %1510 = vmatprep.subr.mxu0 0.0
    %1511 = vmatpush1.msra.mxu0 0.0
    %1512 = vmatprep.subr.mxu0 0.0
    %1513 = vmatpush1.msra.mxu0 0.0
    %1514 = vmatprep.subr.mxu0 0.0
    %1515 = vmatpush1.msra.mxu0 0.0
    %1516 = vmatprep.subr.mxu0 0.0
    %1517 = vmatpush1.msra.mxu0 0.0
    %1518 = vmatprep.subr.mxu0 0.0
    %1519 = vmatpush1.msra.mxu0 0.0
    %1520 = vmatprep.subr.mxu0 0.0
    %1521 = vmatpush1.msra.mxu0 0.0
    %1522 = vmatprep.subr.mxu0 0.0
    %1523 = vmatpush1.msra.mxu0 0.0
    %1524 = vmatprep.subr.mxu0 0.0
    %1525 = vmatpush1.msra.mxu0 0.0
    %1526 = vmatprep.subr.mxu0 0.0
    %1527 = vmatpush1.msra.mxu0 0.0
    %1528 = vmatprep.subr.mxu0 0.0
    %1529 = vmatpush1.msra.mxu0 0.0
    %1530 = vmatprep.subr.mxu0 0.0
    %1531 = vmatpush1.msra.mxu0 0.0
    %1532 = vmatprep.subr.mxu0 0.0
    %1533 = vmatpush1.msra.mxu0 0.0
    %1534 = vmatprep.subr.mxu0 0.0
    %1535 = vmatpush1.msra.mxu0 0.0
    %1536 = vmatprep.subr.mxu0 0.0
    %1537 = vmatpush1.msra.mxu0 0.0
    %1538 = vmatprep.subr.mxu0 0.0
    %1539 = vmatpush1.msra.mxu0 0.0
    %1540 = vmatprep.subr.mxu0 0.0
    %1541 = vmatpush1.msra.mxu0 0.0
    %1542 = vmatprep.subr.mxu0 0.0
    %1543 = vmatpush1.msra.mxu0 0.0
    %1544 = vmatprep.subr.mxu0 0.0
    %1545 = vmatpush1.msra.mxu0 0.0
    %1546 = vmatprep.mubr.f32.mxu0 0.0
    %1547 = vmatmul.mubr.f32.gmra.mrb[0].mxu0 %v1410
    %v1548 = vpop.f32.mrb[0].mxu0
    %v1549 = vadd.f32 0.0, %v1548
    %v1550 = vpop.f32.mrb[0].mxu0
    %1551 = vdwg.mxu0
    %v1553 = vrot.slane %v1549, 6
    %v1555 = vadd.f32 %v218, %v1553
    %v1556 = vmul.f32 %v1555, 0.5
    %v1557 = vtanh.pop %v1556
    %v1558 = vadd.f32 %v1557, 1.0
    %v1559 = vmul.f32 %v1558, 0.5
    %v1560 = vtanh.pop %v1555
    %v1562 = vrot.slane %v1302, 6
    %v1564 = vmul.f32 %v1559, %v1562
    %1566 = vrot.lane.b32.xlu0 %v1560, 64
    %v1567 = vpop.permute.xlu0 %1566
    %v1569 = vmul.f32 %v1559, %v1567
    %1571 = vrot.lane.b32.xlu0 %v1569, 32
    %v1572 = vpop.permute.xlu0 %1571
    %v1574 = vadd.f32 %v1564, %v1572
    %v1575 = vtanh.pop %v1574
    %1577 = vrot.lane.b32.xlu0 %v1575, 64
    %v1578 = vpop.permute.xlu0 %1577
    %v1580 = vmul.f32 %v1559, %v1578
    %1582 = vrot.lane.b32.xlu0 %v1406, 32
    %v1583 = vpop.permute.xlu0 %1582
    %v1584 = vsel %vm221, %v1583, 0
    %1586 = vmatprep.subr.mxu0 0.0
    %1587 = vmatpush1.msra.mxu0 %v119
    %1588 = vmatprep.subr.mxu0 0.0
    %1589 = vmatpush1.msra.mxu0 %v120
    %1590 = vmatprep.subr.mxu0 0.0
    %1591 = vmatpush1.msra.mxu0 %v121
    %1592 = vmatprep.subr.mxu0 0.0
    %1593 = vmatpush1.msra.mxu0 %v122
    %1594 = vmatprep.subr.mxu0 0.0
    %1595 = vmatpush1.msra.mxu0 0.0
    %1596 = vmatprep.subr.mxu0 0.0
    %1597 = vmatpush1.msra.mxu0 0.0
    %1598 = vmatprep.subr.mxu0 0.0
    %1599 = vmatpush1.msra.mxu0 0.0
    %1600 = vmatprep.subr.mxu0 0.0
    %1601 = vmatpush1.msra.mxu0 0.0
    %1602 = vmatprep.subr.mxu0 0.0
    %1603 = vmatpush1.msra.mxu0 0.0
    %1604 = vmatprep.subr.mxu0 0.0
    %1605 = vmatpush1.msra.mxu0 0.0
    %1606 = vmatprep.subr.mxu0 0.0
    %1607 = vmatpush1.msra.mxu0 0.0
    %1608 = vmatprep.subr.mxu0 0.0
    %1609 = vmatpush1.msra.mxu0 0.0
    %1610 = vmatprep.subr.mxu0 0.0
    %1611 = vmatpush1.msra.mxu0 0.0
    %1612 = vmatprep.subr.mxu0 0.0
    %1613 = vmatpush1.msra.mxu0 0.0
    %1614 = vmatprep.subr.mxu0 0.0
    %1615 = vmatpush1.msra.mxu0 0.0
    %1616 = vmatprep.subr.mxu0 0.0
    %1617 = vmatpush1.msra.mxu0 0.0
    %1618 = vmatprep.subr.mxu0 0.0
    %1619 = vmatpush1.msra.mxu0 0.0
    %1620 = vmatprep.subr.mxu0 0.0
    %1621 = vmatpush1.msra.mxu0 0.0
    %1622 = vmatprep.subr.mxu0 0.0
    %1623 = vmatpush1.msra.mxu0 0.0
    %1624 = vmatprep.subr.mxu0 0.0
    %1625 = vmatpush1.msra.mxu0 0.0
    %1626 = vmatprep.subr.mxu0 0.0
    %1627 = vmatpush1.msra.mxu0 0.0
    %1628 = vmatprep.subr.mxu0 0.0
    %1629 = vmatpush1.msra.mxu0 0.0
    %1630 = vmatprep.subr.mxu0 0.0
    %1631 = vmatpush1.msra.mxu0 0.0
    %1632 = vmatprep.subr.mxu0 0.0
    %1633 = vmatpush1.msra.mxu0 0.0
    %1634 = vmatprep.subr.mxu0 0.0
    %1635 = vmatpush1.msra.mxu0 0.0
    %1636 = vmatprep.subr.mxu0 0.0
    %1637 = vmatpush1.msra.mxu0 0.0
    %1638 = vmatprep.subr.mxu0 0.0
    %1639 = vmatpush1.msra.mxu0 0.0
    %1640 = vmatprep.subr.mxu0 0.0
    %1641 = vmatpush1.msra.mxu0 0.0
    %1642 = vmatprep.subr.mxu0 0.0
    %1643 = vmatpush1.msra.mxu0 0.0
    %1644 = vmatprep.subr.mxu0 0.0
    %1645 = vmatpush1.msra.mxu0 0.0
    %1646 = vmatprep.subr.mxu0 0.0
    %1647 = vmatpush1.msra.mxu0 0.0
    %1648 = vmatprep.subr.mxu0 0.0
    %1649 = vmatpush1.msra.mxu0 0.0
    %1650 = vmatprep.mubr.f32.mxu0 0.0
    %1651 = vmatmul.mubr.f32.gmra.mrb[0].mxu0 %v1584
    %v1652 = vpop.f32.mrb[0].mxu0
    %v1653 = vadd.f32 0.0, %v1652
    %v1654 = vpop.f32.mrb[0].mxu0
    %1655 = vdwg.mxu0
    %v1656 = vadd.f32 %v1479, %v1653
    %v1657 = vmul.f32 %v1656, 0.5
    %v1658 = vtanh.pop %v1657
    %v1659 = vadd.f32 %v1658, 1.0
    %v1660 = vmul.f32 %v1659, 0.5
    %v1661 = vtanh.pop %v1656
    %v1662 = vmul.f32 %v1660, %v1400
    %1664 = vrot.lane.b32.xlu0 %v1661, 64
    %v1665 = vpop.permute.xlu0 %1664
    %v1667 = vmul.f32 %v1660, %v1665
    %1669 = vrot.lane.b32.xlu0 %v1667, 32
    %v1670 = vpop.permute.xlu0 %1669
    %v1672 = vadd.f32 %v1662, %v1670
    %v1673 = vtanh.pop %v1672
    %1675 = vrot.lane.b32.xlu0 %v1673, 64
    %v1676 = vpop.permute.xlu0 %1675
    %v1678 = vmul.f32 %v1660, %v1676
    %v1680 = vrot.slane %v1580, 2
    %1681 = vrot.lane.b32.xlu0 %v1680, 32
    %v1682 = vpop.permute.xlu0 %1681
    %v1683 = vsel %vm221, %v1682, 0
    %1685 = vmatprep.subr.mxu0 0.0
    %1686 = vmatpush1.msra.mxu0 %v123
    %1687 = vmatprep.subr.mxu0 0.0
    %1688 = vmatpush1.msra.mxu0 %v124
    %1689 = vmatprep.subr.mxu0 0.0
    %1690 = vmatpush1.msra.mxu0 %v125
    %1691 = vmatprep.subr.mxu0 0.0
    %1692 = vmatpush1.msra.mxu0 %v126
    %1693 = vmatprep.subr.mxu0 0.0
    %1694 = vmatpush1.msra.mxu0 0.0
    %1695 = vmatprep.subr.mxu0 0.0
    %1696 = vmatpush1.msra.mxu0 0.0
    %1697 = vmatprep.subr.mxu0 0.0
    %1698 = vmatpush1.msra.mxu0 0.0
    %1699 = vmatprep.subr.mxu0 0.0
    %1700 = vmatpush1.msra.mxu0 0.0
    %1701 = vmatprep.subr.mxu0 0.0
    %1702 = vmatpush1.msra.mxu0 0.0
    %1703 = vmatprep.subr.mxu0 0.0
    %1704 = vmatpush1.msra.mxu0 0.0
    %1705 = vmatprep.subr.mxu0 0.0
    %1706 = vmatpush1.msra.mxu0 0.0
    %1707 = vmatprep.subr.mxu0 0.0
    %1708 = vmatpush1.msra.mxu0 0.0
    %1709 = vmatprep.subr.mxu0 0.0
    %1710 = vmatpush1.msra.mxu0 0.0
    %1711 = vmatprep.subr.mxu0 0.0
    %1712 = vmatpush1.msra.mxu0 0.0
    %1713 = vmatprep.subr.mxu0 0.0
    %1714 = vmatpush1.msra.mxu0 0.0
    %1715 = vmatprep.subr.mxu0 0.0
    %1716 = vmatpush1.msra.mxu0 0.0
    %1717 = vmatprep.subr.mxu0 0.0
    %1718 = vmatpush1.msra.mxu0 0.0
    %1719 = vmatprep.subr.mxu0 0.0
    %1720 = vmatpush1.msra.mxu0 0.0
    %1721 = vmatprep.subr.mxu0 0.0
    %1722 = vmatpush1.msra.mxu0 0.0
    %1723 = vmatprep.subr.mxu0 0.0
    %1724 = vmatpush1.msra.mxu0 0.0
    %1725 = vmatprep.subr.mxu0 0.0
    %1726 = vmatpush1.msra.mxu0 0.0
    %1727 = vmatprep.subr.mxu0 0.0
    %1728 = vmatpush1.msra.mxu0 0.0
    %1729 = vmatprep.subr.mxu0 0.0
    %1730 = vmatpush1.msra.mxu0 0.0
    %1731 = vmatprep.subr.mxu0 0.0
    %1732 = vmatpush1.msra.mxu0 0.0
    %1733 = vmatprep.subr.mxu0 0.0
    %1734 = vmatpush1.msra.mxu0 0.0
    %1735 = vmatprep.subr.mxu0 0.0
    %1736 = vmatpush1.msra.mxu0 0.0
    %1737 = vmatprep.subr.mxu0 0.0
    %1738 = vmatpush1.msra.mxu0 0.0
    %1739 = vmatprep.subr.mxu0 0.0
    %1740 = vmatpush1.msra.mxu0 0.0
    %1741 = vmatprep.subr.mxu0 0.0
    %1742 = vmatpush1.msra.mxu0 0.0
    %1743 = vmatprep.subr.mxu0 0.0
    %1744 = vmatpush1.msra.mxu0 0.0
    %1745 = vmatprep.subr.mxu0 0.0
    %1746 = vmatpush1.msra.mxu0 0.0
    %1747 = vmatprep.subr.mxu0 0.0
    %1748 = vmatpush1.msra.mxu0 0.0
    %1749 = vmatprep.mubr.f32.mxu0 0.0
    %1750 = vmatmul.mubr.f32.gmra.mrb[0].mxu0 %v1683
    %v1751 = vpop.f32.mrb[0].mxu0
    %v1752 = vadd.f32 %v322, %v1751
    %v1753 = vpop.f32.mrb[0].mxu0
    %1754 = vdwg.mxu0
    %1755 = vmatprep.subr.mxu0 0.0
    %1756 = vmatpush1.msra.mxu0 %v115
    %1757 = vmatprep.subr.mxu0 0.0
    %1758 = vmatpush1.msra.mxu0 %v116
    %1759 = vmatprep.subr.mxu0 0.0
    %1760 = vmatpush1.msra.mxu0 %v117
    %1761 = vmatprep.subr.mxu0 0.0
    %1762 = vmatpush1.msra.mxu0 %v118
    %1763 = vmatprep.subr.mxu0 0.0
    %1764 = vmatpush1.msra.mxu0 0.0
    %1765 = vmatprep.subr.mxu0 0.0
    %1766 = vmatpush1.msra.mxu0 0.0
    %1767 = vmatprep.subr.mxu0 0.0
    %1768 = vmatpush1.msra.mxu0 0.0
    %1769 = vmatprep.subr.mxu0 0.0
    %1770 = vmatpush1.msra.mxu0 0.0
    %1771 = vmatprep.subr.mxu0 0.0
    %1772 = vmatpush1.msra.mxu0 0.0
    %1773 = vmatprep.subr.mxu0 0.0
    %1774 = vmatpush1.msra.mxu0 0.0
    %1775 = vmatprep.subr.mxu0 0.0
    %1776 = vmatpush1.msra.mxu0 0.0
    %1777 = vmatprep.subr.mxu0 0.0
    %1778 = vmatpush1.msra.mxu0 0.0
    %1779 = vmatprep.subr.mxu0 0.0
    %1780 = vmatpush1.msra.mxu0 0.0
    %1781 = vmatprep.subr.mxu0 0.0
    %1782 = vmatpush1.msra.mxu0 0.0
    %1783 = vmatprep.subr.mxu0 0.0
    %1784 = vmatpush1.msra.mxu0 0.0
    %1785 = vmatprep.subr.mxu0 0.0
    %1786 = vmatpush1.msra.mxu0 0.0
    %1787 = vmatprep.subr.mxu0 0.0
    %1788 = vmatpush1.msra.mxu0 0.0
    %1789 = vmatprep.subr.mxu0 0.0
    %1790 = vmatpush1.msra.mxu0 0.0
    %1791 = vmatprep.subr.mxu0 0.0
    %1792 = vmatpush1.msra.mxu0 0.0
    %1793 = vmatprep.subr.mxu0 0.0
    %1794 = vmatpush1.msra.mxu0 0.0
    %1795 = vmatprep.subr.mxu0 0.0
    %1796 = vmatpush1.msra.mxu0 0.0
    %1797 = vmatprep.subr.mxu0 0.0
    %1798 = vmatpush1.msra.mxu0 0.0
    %1799 = vmatprep.subr.mxu0 0.0
    %1800 = vmatpush1.msra.mxu0 0.0
    %1801 = vmatprep.subr.mxu0 0.0
    %1802 = vmatpush1.msra.mxu0 0.0
    %1803 = vmatprep.subr.mxu0 0.0
    %1804 = vmatpush1.msra.mxu0 0.0
    %1805 = vmatprep.subr.mxu0 0.0
    %1806 = vmatpush1.msra.mxu0 0.0
    %1807 = vmatprep.subr.mxu0 0.0
    %1808 = vmatpush1.msra.mxu0 0.0
    %1809 = vmatprep.subr.mxu0 0.0
    %1810 = vmatpush1.msra.mxu0 0.0
    %1811 = vmatprep.subr.mxu0 0.0
    %1812 = vmatpush1.msra.mxu0 0.0
    %1813 = vmatprep.subr.mxu0 0.0
    %1814 = vmatpush1.msra.mxu0 0.0
    %1815 = vmatprep.subr.mxu0 0.0
    %1816 = vmatpush1.msra.mxu0 0.0
    %1817 = vmatprep.subr.mxu0 0.0
    %1818 = vmatpush1.msra.mxu0 0.0
    %1819 = vmatprep.mubr.f32.mxu0 0.0
    %1820 = vmatmul.mubr.f32.gmra.mrb[0].mxu0 %v1683
    %v1821 = vpop.f32.mrb[0].mxu0
    %v1822 = vadd.f32 0.0, %v1821
    %v1823 = vpop.f32.mrb[0].mxu0
    %1824 = vdwg.mxu0
    %v1826 = vrot.slane %v1822, 4
    %v1828 = vadd.f32 %v218, %v1826
    %v1829 = vmul.f32 %v1828, 0.5
    %v1830 = vtanh.pop %v1829
    %v1831 = vadd.f32 %v1830, 1.0
    %v1832 = vmul.f32 %v1831, 0.5
    %v1833 = vtanh.pop %v1828
    %v1835 = vrot.slane %v1574, 6
    %v1837 = vmul.f32 %v1832, %v1835
    %1839 = vrot.lane.b32.xlu0 %v1833, 64
    %v1840 = vpop.permute.xlu0 %1839
    %v1842 = vmul.f32 %v1832, %v1840
    %1844 = vrot.lane.b32.xlu0 %v1842, 32
    %v1845 = vpop.permute.xlu0 %1844
    %v1847 = vadd.f32 %v1837, %v1845
    %v1848 = vtanh.pop %v1847
    %1850 = vrot.lane.b32.xlu0 %v1848, 64
    %v1851 = vpop.permute.xlu0 %1850
    %v1853 = vmul.f32 %v1832, %v1851
    %1855 = vrot.lane.b32.xlu0 %v1678, 32
    %v1856 = vpop.permute.xlu0 %1855
    %v1857 = vsel %vm221, %v1856, 0
    %1859 = vmatprep.subr.mxu0 0.0
    %1860 = vmatpush1.msra.mxu0 %v119
    %1861 = vmatprep.subr.mxu0 0.0
    %1862 = vmatpush1.msra.mxu0 %v120
    %1863 = vmatprep.subr.mxu0 0.0
    %1864 = vmatpush1.msra.mxu0 %v121
    %1865 = vmatprep.subr.mxu0 0.0
    %1866 = vmatpush1.msra.mxu0 %v122
    %1867 = vmatprep.subr.mxu0 0.0
    %1868 = vmatpush1.msra.mxu0 0.0
    %1869 = vmatprep.subr.mxu0 0.0
    %1870 = vmatpush1.msra.mxu0 0.0
    %1871 = vmatprep.subr.mxu0 0.0
    %1872 = vmatpush1.msra.mxu0 0.0
    %1873 = vmatprep.subr.mxu0 0.0
    %1874 = vmatpush1.msra.mxu0 0.0
    %1875 = vmatprep.subr.mxu0 0.0
    %1876 = vmatpush1.msra.mxu0 0.0
    %1877 = vmatprep.subr.mxu0 0.0
    %1878 = vmatpush1.msra.mxu0 0.0
    %1879 = vmatprep.subr.mxu0 0.0
    %1880 = vmatpush1.msra.mxu0 0.0
    %1881 = vmatprep.subr.mxu0 0.0
    %1882 = vmatpush1.msra.mxu0 0.0
    %1883 = vmatprep.subr.mxu0 0.0
    %1884 = vmatpush1.msra.mxu0 0.0
    %1885 = vmatprep.subr.mxu0 0.0
    %1886 = vmatpush1.msra.mxu0 0.0
    %1887 = vmatprep.subr.mxu0 0.0
    %1888 = vmatpush1.msra.mxu0 0.0
    %1889 = vmatprep.subr.mxu0 0.0
    %1890 = vmatpush1.msra.mxu0 0.0
    %1891 = vmatprep.subr.mxu0 0.0
    %1892 = vmatpush1.msra.mxu0 0.0
    %1893 = vmatprep.subr.mxu0 0.0
    %1894 = vmatpush1.msra.mxu0 0.0
    %1895 = vmatprep.subr.mxu0 0.0
    %1896 = vmatpush1.msra.mxu0 0.0
    %1897 = vmatprep.subr.mxu0 0.0
    %1898 = vmatpush1.msra.mxu0 0.0
    %1899 = vmatprep.subr.mxu0 0.0
    %1900 = vmatpush1.msra.mxu0 0.0
    %1901 = vmatprep.subr.mxu0 0.0
    %1902 = vmatpush1.msra.mxu0 0.0
    %1903 = vmatprep.subr.mxu0 0.0
    %1904 = vmatpush1.msra.mxu0 0.0
    %1905 = vmatprep.subr.mxu0 0.0
    %1906 = vmatpush1.msra.mxu0 0.0
    %1907 = vmatprep.subr.mxu0 0.0
    %1908 = vmatpush1.msra.mxu0 0.0
    %1909 = vmatprep.subr.mxu0 0.0
    %1910 = vmatpush1.msra.mxu0 0.0
    %1911 = vmatprep.subr.mxu0 0.0
    %1912 = vmatpush1.msra.mxu0 0.0
    %1913 = vmatprep.subr.mxu0 0.0
    %1914 = vmatpush1.msra.mxu0 0.0
    %1915 = vmatprep.subr.mxu0 0.0
    %1916 = vmatpush1.msra.mxu0 0.0
    %1917 = vmatprep.subr.mxu0 0.0
    %1918 = vmatpush1.msra.mxu0 0.0
    %1919 = vmatprep.subr.mxu0 0.0
    %1920 = vmatpush1.msra.mxu0 0.0
    %1921 = vmatprep.subr.mxu0 0.0
    %1922 = vmatpush1.msra.mxu0 0.0
    %1923 = vmatprep.mubr.f32.mxu0 0.0
    %1924 = vmatmul.mubr.f32.gmra.mrb[0].mxu0 %v1857
    %v1925 = vpop.f32.mrb[0].mxu0
    %v1926 = vadd.f32 0.0, %v1925
    %v1927 = vpop.f32.mrb[0].mxu0
    %1928 = vdwg.mxu0
    %v1929 = vadd.f32 %v1752, %v1926
    %v1930 = vmul.f32 %v1929, 0.5
    %v1931 = vtanh.pop %v1930
    %v1932 = vadd.f32 %v1931, 1.0
    %v1933 = vmul.f32 %v1932, 0.5
    %v1934 = vtanh.pop %v1929
    %v1935 = vmul.f32 %v1933, %v1672
    %1937 = vrot.lane.b32.xlu0 %v1934, 64
    %v1938 = vpop.permute.xlu0 %1937
    %v1940 = vmul.f32 %v1933, %v1938
    %1942 = vrot.lane.b32.xlu0 %v1940, 32
    %v1943 = vpop.permute.xlu0 %1942
    %v1945 = vadd.f32 %v1935, %v1943
    %v1946 = vtanh.pop %v1945
    %1948 = vrot.lane.b32.xlu0 %v1946, 64
    %v1949 = vpop.permute.xlu0 %1948
    %v1951 = vmul.f32 %v1933, %v1949
    %v1953 = vrot.slane %v1853, 4
    %1954 = vrot.lane.b32.xlu0 %v1953, 32
    %v1955 = vpop.permute.xlu0 %1954
    %v1956 = vsel %vm221, %v1955, 0
    %1958 = vmatprep.subr.mxu0 0.0
    %1959 = vmatpush1.msra.mxu0 %v123
    %1960 = vmatprep.subr.mxu0 0.0
    %1961 = vmatpush1.msra.mxu0 %v124
    %1962 = vmatprep.subr.mxu0 0.0
    %1963 = vmatpush1.msra.mxu0 %v125
    %1964 = vmatprep.subr.mxu0 0.0
    %1965 = vmatpush1.msra.mxu0 %v126
    %1966 = vmatprep.subr.mxu0 0.0
    %1967 = vmatpush1.msra.mxu0 0.0
    %1968 = vmatprep.subr.mxu0 0.0
    %1969 = vmatpush1.msra.mxu0 0.0
    %1970 = vmatprep.subr.mxu0 0.0
    %1971 = vmatpush1.msra.mxu0 0.0
    %1972 = vmatprep.subr.mxu0 0.0
    %1973 = vmatpush1.msra.mxu0 0.0
    %1974 = vmatprep.subr.mxu0 0.0
    %1975 = vmatpush1.msra.mxu0 0.0
    %1976 = vmatprep.subr.mxu0 0.0
    %1977 = vmatpush1.msra.mxu0 0.0
    %1978 = vmatprep.subr.mxu0 0.0
    %1979 = vmatpush1.msra.mxu0 0.0
    %1980 = vmatprep.subr.mxu0 0.0
    %1981 = vmatpush1.msra.mxu0 0.0
    %1982 = vmatprep.subr.mxu0 0.0
    %1983 = vmatpush1.msra.mxu0 0.0
    %1984 = vmatprep.subr.mxu0 0.0
    %1985 = vmatpush1.msra.mxu0 0.0
    %1986 = vmatprep.subr.mxu0 0.0
    %1987 = vmatpush1.msra.mxu0 0.0
    %1988 = vmatprep.subr.mxu0 0.0
    %1989 = vmatpush1.msra.mxu0 0.0
    %1990 = vmatprep.subr.mxu0 0.0
    %1991 = vmatpush1.msra.mxu0 0.0
    %1992 = vmatprep.subr.mxu0 0.0
    %1993 = vmatpush1.msra.mxu0 0.0
    %1994 = vmatprep.subr.mxu0 0.0
    %1995 = vmatpush1.msra.mxu0 0.0
    %1996 = vmatprep.subr.mxu0 0.0
    %1997 = vmatpush1.msra.mxu0 0.0
    %1998 = vmatprep.subr.mxu0 0.0
    %1999 = vmatpush1.msra.mxu0 0.0
    %2000 = vmatprep.subr.mxu0 0.0
    %2001 = vmatpush1.msra.mxu0 0.0
    %2002 = vmatprep.subr.mxu0 0.0
    %2003 = vmatpush1.msra.mxu0 0.0
    %2004 = vmatprep.subr.mxu0 0.0
    %2005 = vmatpush1.msra.mxu0 0.0
    %2006 = vmatprep.subr.mxu0 0.0
    %2007 = vmatpush1.msra.mxu0 0.0
    %2008 = vmatprep.subr.mxu0 0.0
    %2009 = vmatpush1.msra.mxu0 0.0
    %2010 = vmatprep.subr.mxu0 0.0
    %2011 = vmatpush1.msra.mxu0 0.0
    %2012 = vmatprep.subr.mxu0 0.0
    %2013 = vmatpush1.msra.mxu0 0.0
    %2014 = vmatprep.subr.mxu0 0.0
    %2015 = vmatpush1.msra.mxu0 0.0
    %2016 = vmatprep.subr.mxu0 0.0
    %2017 = vmatpush1.msra.mxu0 0.0
    %2018 = vmatprep.subr.mxu0 0.0
    %2019 = vmatpush1.msra.mxu0 0.0
    %2020 = vmatprep.subr.mxu0 0.0
    %2021 = vmatpush1.msra.mxu0 0.0
    %2022 = vmatprep.mubr.f32.mxu0 0.0
    %2023 = vmatmul.mubr.f32.gmra.mrb[0].mxu0 %v1956
    %v2024 = vpop.f32.mrb[0].mxu0
    %v2025 = vadd.f32 %v322, %v2024
    %v2026 = vpop.f32.mrb[0].mxu0
    %2027 = vdwg.mxu0
    %2028 = vmatprep.subr.mxu0 0.0
    %2029 = vmatpush1.msra.mxu0 %v115
    %2030 = vmatprep.subr.mxu0 0.0
    %2031 = vmatpush1.msra.mxu0 %v116
    %2032 = vmatprep.subr.mxu0 0.0
    %2033 = vmatpush1.msra.mxu0 %v117
    %2034 = vmatprep.subr.mxu0 0.0
    %2035 = vmatpush1.msra.mxu0 %v118
    %2036 = vmatprep.subr.mxu0 0.0
    %2037 = vmatpush1.msra.mxu0 0.0
    %2038 = vmatprep.subr.mxu0 0.0
    %2039 = vmatpush1.msra.mxu0 0.0
    %2040 = vmatprep.subr.mxu0 0.0
    %2041 = vmatpush1.msra.mxu0 0.0
    %2042 = vmatprep.subr.mxu0 0.0
    %2043 = vmatpush1.msra.mxu0 0.0
    %2044 = vmatprep.subr.mxu0 0.0
    %2045 = vmatpush1.msra.mxu0 0.0
    %2046 = vmatprep.subr.mxu0 0.0
    %2047 = vmatpush1.msra.mxu0 0.0
    %2048 = vmatprep.subr.mxu0 0.0
    %2049 = vmatpush1.msra.mxu0 0.0
    %2050 = vmatprep.subr.mxu0 0.0
    %2051 = vmatpush1.msra.mxu0 0.0
    %2052 = vmatprep.subr.mxu0 0.0
    %2053 = vmatpush1.msra.mxu0 0.0
    %2054 = vmatprep.subr.mxu0 0.0
    %2055 = vmatpush1.msra.mxu0 0.0
    %2056 = vmatprep.subr.mxu0 0.0
    %2057 = vmatpush1.msra.mxu0 0.0
    %2058 = vmatprep.subr.mxu0 0.0
    %2059 = vmatpush1.msra.mxu0 0.0
    %2060 = vmatprep.subr.mxu0 0.0
    %2061 = vmatpush1.msra.mxu0 0.0
    %2062 = vmatprep.subr.mxu0 0.0
    %2063 = vmatpush1.msra.mxu0 0.0
    %2064 = vmatprep.subr.mxu0 0.0
    %2065 = vmatpush1.msra.mxu0 0.0
    %2066 = vmatprep.subr.mxu0 0.0
    %2067 = vmatpush1.msra.mxu0 0.0
    %2068 = vmatprep.subr.mxu0 0.0
    %2069 = vmatpush1.msra.mxu0 0.0
    %2070 = vmatprep.subr.mxu0 0.0
    %2071 = vmatpush1.msra.mxu0 0.0
    %2072 = vmatprep.subr.mxu0 0.0
    %2073 = vmatpush1.msra.mxu0 0.0
    %2074 = vmatprep.subr.mxu0 0.0
    %2075 = vmatpush1.msra.mxu0 0.0
    %2076 = vmatprep.subr.mxu0 0.0
    %2077 = vmatpush1.msra.mxu0 0.0
    %2078 = vmatprep.subr.mxu0 0.0
    %2079 = vmatpush1.msra.mxu0 0.0
    %2080 = vmatprep.subr.mxu0 0.0
    %2081 = vmatpush1.msra.mxu0 0.0
    %2082 = vmatprep.subr.mxu0 0.0
    %2083 = vmatpush1.msra.mxu0 0.0
    %2084 = vmatprep.subr.mxu0 0.0
    %2085 = vmatpush1.msra.mxu0 0.0
    %2086 = vmatprep.subr.mxu0 0.0
    %2087 = vmatpush1.msra.mxu0 0.0
    %2088 = vmatprep.subr.mxu0 0.0
    %2089 = vmatpush1.msra.mxu0 0.0
    %2090 = vmatprep.subr.mxu0 0.0
    %2091 = vmatpush1.msra.mxu0 0.0
    %2092 = vmatprep.mubr.f32.mxu0 0.0
    %2093 = vmatmul.mubr.f32.gmra.mrb[0].mxu0 %v1956
    %v2094 = vpop.f32.mrb[0].mxu0
    %v2095 = vadd.f32 0.0, %v2094
    %v2096 = vpop.f32.mrb[0].mxu0
    %2097 = vdwg.mxu0
    %v2099 = vrot.slane %v2095, 2
    %v2101 = vadd.f32 %v218, %v2099
    %v2102 = vmul.f32 %v2101, 0.5
    %v2103 = vtanh.pop %v2102
    %v2104 = vadd.f32 %v2103, 1.0
    %v2105 = vmul.f32 %v2104, 0.5
    %v2106 = vtanh.pop %v2101
    %v2108 = vrot.slane %v1847, 6
    %v2110 = vmul.f32 %v2105, %v2108
    %2112 = vrot.lane.b32.xlu0 %v2106, 64
    %v2113 = vpop.permute.xlu0 %2112
    %v2115 = vmul.f32 %v2105, %v2113
    %2117 = vrot.lane.b32.xlu0 %v2115, 32
    %v2118 = vpop.permute.xlu0 %2117
    %v2120 = vadd.f32 %v2110, %v2118
    %v2121 = vtanh.pop %v2120
    %2123 = vrot.lane.b32.xlu0 %v2121, 64
    %v2124 = vpop.permute.xlu0 %2123
    %v2126 = vmul.f32 %v2105, %v2124
    %2128 = vrot.lane.b32.xlu0 %v1951, 32
    %v2129 = vpop.permute.xlu0 %2128
    %v2130 = vsel %vm221, %v2129, 0
    %2132 = vmatprep.subr.mxu0 0.0
    %2133 = vmatpush1.msra.mxu0 %v119
    %2134 = vmatprep.subr.mxu0 0.0
    %2135 = vmatpush1.msra.mxu0 %v120
    %2136 = vmatprep.subr.mxu0 0.0
    %2137 = vmatpush1.msra.mxu0 %v121
    %2138 = vmatprep.subr.mxu0 0.0
    %2139 = vmatpush1.msra.mxu0 %v122
    %2140 = vmatprep.subr.mxu0 0.0
    %2141 = vmatpush1.msra.mxu0 0.0
    %2142 = vmatprep.subr.mxu0 0.0
    %2143 = vmatpush1.msra.mxu0 0.0
    %2144 = vmatprep.subr.mxu0 0.0
    %2145 = vmatpush1.msra.mxu0 0.0
    %2146 = vmatprep.subr.mxu0 0.0
    %2147 = vmatpush1.msra.mxu0 0.0
    %2148 = vmatprep.subr.mxu0 0.0
    %2149 = vmatpush1.msra.mxu0 0.0
    %2150 = vmatprep.subr.mxu0 0.0
    %2151 = vmatpush1.msra.mxu0 0.0
    %2152 = vmatprep.subr.mxu0 0.0
    %2153 = vmatpush1.msra.mxu0 0.0
    %2154 = vmatprep.subr.mxu0 0.0
    %2155 = vmatpush1.msra.mxu0 0.0
    %2156 = vmatprep.subr.mxu0 0.0
    %2157 = vmatpush1.msra.mxu0 0.0
    %2158 = vmatprep.subr.mxu0 0.0
    %2159 = vmatpush1.msra.mxu0 0.0
    %2160 = vmatprep.subr.mxu0 0.0
    %2161 = vmatpush1.msra.mxu0 0.0
    %2162 = vmatprep.subr.mxu0 0.0
    %2163 = vmatpush1.msra.mxu0 0.0
    %2164 = vmatprep.subr.mxu0 0.0
    %2165 = vmatpush1.msra.mxu0 0.0
    %2166 = vmatprep.subr.mxu0 0.0
    %2167 = vmatpush1.msra.mxu0 0.0
    %2168 = vmatprep.subr.mxu0 0.0
    %2169 = vmatpush1.msra.mxu0 0.0
    %2170 = vmatprep.subr.mxu0 0.0
    %2171 = vmatpush1.msra.mxu0 0.0
    %2172 = vmatprep.subr.mxu0 0.0
    %2173 = vmatpush1.msra.mxu0 0.0
    %2174 = vmatprep.subr.mxu0 0.0
    %2175 = vmatpush1.msra.mxu0 0.0
    %2176 = vmatprep.subr.mxu0 0.0
    %2177 = vmatpush1.msra.mxu0 0.0
    %2178 = vmatprep.subr.mxu0 0.0
    %2179 = vmatpush1.msra.mxu0 0.0
    %2180 = vmatprep.subr.mxu0 0.0
    %2181 = vmatpush1.msra.mxu0 0.0
    %2182 = vmatprep.subr.mxu0 0.0
    %2183 = vmatpush1.msra.mxu0 0.0
    %2184 = vmatprep.subr.mxu0 0.0
    %2185 = vmatpush1.msra.mxu0 0.0
    %2186 = vmatprep.subr.mxu0 0.0
    %2187 = vmatpush1.msra.mxu0 0.0
    %2188 = vmatprep.subr.mxu0 0.0
    %2189 = vmatpush1.msra.mxu0 0.0
    %2190 = vmatprep.subr.mxu0 0.0
    %2191 = vmatpush1.msra.mxu0 0.0
    %2192 = vmatprep.subr.mxu0 0.0
    %2193 = vmatpush1.msra.mxu0 0.0
    %2194 = vmatprep.subr.mxu0 0.0
    %2195 = vmatpush1.msra.mxu0 0.0
    %2196 = vmatprep.mubr.f32.mxu0 0.0
    %2197 = vmatmul.mubr.f32.gmra.mrb[0].mxu0 %v2130
    %v2198 = vpop.f32.mrb[0].mxu0
    %v2199 = vadd.f32 0.0, %v2198
    %v2200 = vpop.f32.mrb[0].mxu0
    %2201 = vdwg.mxu0
    %v2202 = vadd.f32 %v2025, %v2199
    %v2203 = vmul.f32 %v2202, 0.5
    %v2204 = vtanh.pop %v2203
    %v2205 = vadd.f32 %v2204, 1.0
    %v2206 = vmul.f32 %v2205, 0.5
    %v2207 = vtanh.pop %v2202
    %v2208 = vmul.f32 %v2206, %v1945
    %2210 = vrot.lane.b32.xlu0 %v2207, 64
    %v2211 = vpop.permute.xlu0 %2210
    %v2213 = vmul.f32 %v2206, %v2211
    %2215 = vrot.lane.b32.xlu0 %v2213, 32
    %v2216 = vpop.permute.xlu0 %2215
    %v2218 = vadd.f32 %v2208, %v2216
    %v2219 = vtanh.pop %v2218
    %2221 = vrot.lane.b32.xlu0 %v2219, 64
    %v2222 = vpop.permute.xlu0 %2221
    %v2224 = vmul.f32 %v2206, %v2222
    %v2226 = vrot.slane %v2126, 6
    %2227 = vrot.lane.b32.xlu0 %v2226, 32
    %v2228 = vpop.permute.xlu0 %2227
    %v2229 = vsel %vm221, %v2228, 0
    %2231 = vmatprep.subr.mxu0 0.0
    %2232 = vmatpush1.msra.mxu0 %v123
    %2233 = vmatprep.subr.mxu0 0.0
    %2234 = vmatpush1.msra.mxu0 %v124
    %2235 = vmatprep.subr.mxu0 0.0
    %2236 = vmatpush1.msra.mxu0 %v125
    %2237 = vmatprep.subr.mxu0 0.0
    %2238 = vmatpush1.msra.mxu0 %v126
    %2239 = vmatprep.subr.mxu0 0.0
    %2240 = vmatpush1.msra.mxu0 0.0
    %2241 = vmatprep.subr.mxu0 0.0
    %2242 = vmatpush1.msra.mxu0 0.0
    %2243 = vmatprep.subr.mxu0 0.0
    %2244 = vmatpush1.msra.mxu0 0.0
    %2245 = vmatprep.subr.mxu0 0.0
    %2246 = vmatpush1.msra.mxu0 0.0
    %2247 = vmatprep.subr.mxu0 0.0
    %2248 = vmatpush1.msra.mxu0 0.0
    %2249 = vmatprep.subr.mxu0 0.0
    %2250 = vmatpush1.msra.mxu0 0.0
    %2251 = vmatprep.subr.mxu0 0.0
    %2252 = vmatpush1.msra.mxu0 0.0
    %2253 = vmatprep.subr.mxu0 0.0
    %2254 = vmatpush1.msra.mxu0 0.0
    %2255 = vmatprep.subr.mxu0 0.0
    %2256 = vmatpush1.msra.mxu0 0.0
    %2257 = vmatprep.subr.mxu0 0.0
    %2258 = vmatpush1.msra.mxu0 0.0
    %2259 = vmatprep.subr.mxu0 0.0
    %2260 = vmatpush1.msra.mxu0 0.0
    %2261 = vmatprep.subr.mxu0 0.0
    %2262 = vmatpush1.msra.mxu0 0.0
    %2263 = vmatprep.subr.mxu0 0.0
    %2264 = vmatpush1.msra.mxu0 0.0
    %2265 = vmatprep.subr.mxu0 0.0
    %2266 = vmatpush1.msra.mxu0 0.0
    %2267 = vmatprep.subr.mxu0 0.0
    %2268 = vmatpush1.msra.mxu0 0.0
    %2269 = vmatprep.subr.mxu0 0.0
    %2270 = vmatpush1.msra.mxu0 0.0
    %2271 = vmatprep.subr.mxu0 0.0
    %2272 = vmatpush1.msra.mxu0 0.0
    %2273 = vmatprep.subr.mxu0 0.0
    %2274 = vmatpush1.msra.mxu0 0.0
    %2275 = vmatprep.subr.mxu0 0.0
    %2276 = vmatpush1.msra.mxu0 0.0
    %2277 = vmatprep.subr.mxu0 0.0
    %2278 = vmatpush1.msra.mxu0 0.0
    %2279 = vmatprep.subr.mxu0 0.0
    %2280 = vmatpush1.msra.mxu0 0.0
    %2281 = vmatprep.subr.mxu0 0.0
    %2282 = vmatpush1.msra.mxu0 0.0
    %2283 = vmatprep.subr.mxu0 0.0
    %2284 = vmatpush1.msra.mxu0 0.0
    %2285 = vmatprep.subr.mxu0 0.0
    %2286 = vmatpush1.msra.mxu0 0.0
    %2287 = vmatprep.subr.mxu0 0.0
    %2288 = vmatpush1.msra.mxu0 0.0
    %2289 = vmatprep.subr.mxu0 0.0
    %2290 = vmatpush1.msra.mxu0 0.0
    %2291 = vmatprep.subr.mxu0 0.0
    %2292 = vmatpush1.msra.mxu0 0.0
    %2293 = vmatprep.subr.mxu0 0.0
    %2294 = vmatpush1.msra.mxu0 0.0
    %2295 = vmatprep.mubr.f32.mxu0 0.0
    %2296 = vmatmul.mubr.f32.gmra.mrb[0].mxu0 %v2229
    %v2297 = vpop.f32.mrb[0].mxu0
    %v2298 = vadd.f32 %v322, %v2297
    %v2299 = vpop.f32.mrb[0].mxu0
    %2300 = vdwg.mxu0
    %2302 = vrot.lane.b32.xlu0 %v2224, 32
    %v2303 = vpop.permute.xlu0 %2302
    %v2304 = vsel %vm221, %v2303, 0
    %2306 = vmatprep.subr.mxu0 0.0
    %2307 = vmatpush1.msra.mxu0 %v119
    %2308 = vmatprep.subr.mxu0 0.0
    %2309 = vmatpush1.msra.mxu0 %v120
    %2310 = vmatprep.subr.mxu0 0.0
    %2311 = vmatpush1.msra.mxu0 %v121
    %2312 = vmatprep.subr.mxu0 0.0
    %2313 = vmatpush1.msra.mxu0 %v122
    %2314 = vmatprep.subr.mxu0 0.0
    %2315 = vmatpush1.msra.mxu0 0.0
    %2316 = vmatprep.subr.mxu0 0.0
    %2317 = vmatpush1.msra.mxu0 0.0
    %2318 = vmatprep.subr.mxu0 0.0
    %2319 = vmatpush1.msra.mxu0 0.0
    %2320 = vmatprep.subr.mxu0 0.0
    %2321 = vmatpush1.msra.mxu0 0.0
    %2322 = vmatprep.subr.mxu0 0.0
    %2323 = vmatpush1.msra.mxu0 0.0
    %2324 = vmatprep.subr.mxu0 0.0
    %2325 = vmatpush1.msra.mxu0 0.0
    %2326 = vmatprep.subr.mxu0 0.0
    %2327 = vmatpush1.msra.mxu0 0.0
    %2328 = vmatprep.subr.mxu0 0.0
    %2329 = vmatpush1.msra.mxu0 0.0
    %2330 = vmatprep.subr.mxu0 0.0
    %2331 = vmatpush1.msra.mxu0 0.0
    %2332 = vmatprep.subr.mxu0 0.0
    %2333 = vmatpush1.msra.mxu0 0.0
    %2334 = vmatprep.subr.mxu0 0.0
    %2335 = vmatpush1.msra.mxu0 0.0
    %2336 = vmatprep.subr.mxu0 0.0
    %2337 = vmatpush1.msra.mxu0 0.0
    %2338 = vmatprep.subr.mxu0 0.0
    %2339 = vmatpush1.msra.mxu0 0.0
    %2340 = vmatprep.subr.mxu0 0.0
    %2341 = vmatpush1.msra.mxu0 0.0
    %2342 = vmatprep.subr.mxu0 0.0
    %2343 = vmatpush1.msra.mxu0 0.0
    %2344 = vmatprep.subr.mxu0 0.0
    %2345 = vmatpush1.msra.mxu0 0.0
    %2346 = vmatprep.subr.mxu0 0.0
    %2347 = vmatpush1.msra.mxu0 0.0
    %2348 = vmatprep.subr.mxu0 0.0
    %2349 = vmatpush1.msra.mxu0 0.0
    %2350 = vmatprep.subr.mxu0 0.0
    %2351 = vmatpush1.msra.mxu0 0.0
    %2352 = vmatprep.subr.mxu0 0.0
    %2353 = vmatpush1.msra.mxu0 0.0
    %2354 = vmatprep.subr.mxu0 0.0
    %2355 = vmatpush1.msra.mxu0 0.0
    %2356 = vmatprep.subr.mxu0 0.0
    %2357 = vmatpush1.msra.mxu0 0.0
    %2358 = vmatprep.subr.mxu0 0.0
    %2359 = vmatpush1.msra.mxu0 0.0
    %2360 = vmatprep.subr.mxu0 0.0
    %2361 = vmatpush1.msra.mxu0 0.0
    %2362 = vmatprep.subr.mxu0 0.0
    %2363 = vmatpush1.msra.mxu0 0.0
    %2364 = vmatprep.subr.mxu0 0.0
    %2365 = vmatpush1.msra.mxu0 0.0
    %2366 = vmatprep.subr.mxu0 0.0
    %2367 = vmatpush1.msra.mxu0 0.0
    %2368 = vmatprep.subr.mxu0 0.0
    %2369 = vmatpush1.msra.mxu0 0.0
    %2370 = vmatprep.mubr.f32.mxu0 0.0
    %2371 = vmatmul.mubr.f32.gmra.mrb[0].mxu0 %v2304
    %v2372 = vpop.f32.mrb[0].mxu0
    %v2373 = vadd.f32 0.0, %v2372
    %v2374 = vpop.f32.mrb[0].mxu0
    %2375 = vdwg.mxu0
    %v2376 = vadd.f32 %v2298, %v2373
    %v2377 = vmul.f32 %v2376, 0.5
    %v2378 = vtanh.pop %v2377
    %v2379 = vadd.f32 %v2378, 1.0
    %v2380 = vmul.f32 %v2379, 0.5
    %v2381 = vtanh.pop %v2376
    %v2382 = vmul.f32 %v2380, %v2218
    %2384 = vrot.lane.b32.xlu0 %v2381, 64
    %v2385 = vpop.permute.xlu0 %2384
    %v2387 = vmul.f32 %v2380, %v2385
    %2389 = vrot.lane.b32.xlu0 %v2387, 32
    %v2390 = vpop.permute.xlu0 %2389
    %v2392 = vadd.f32 %v2382, %v2390
    %v2393 = vtanh.pop %v2392
    %2395 = vrot.lane.b32.xlu0 %v2393, 64
    %v2396 = vpop.permute.xlu0 %2395
    %v2398 = vmul.f32 %v2380, %v2396
    %v2399 = vld [vmem:[#allocation11] sm:$0xff]
    %v2400 = vld [vmem:[#allocation11 + $0x8] sm:$0xff]
    %v2401 = vld [vmem:[#allocation11 + $0x10] sm:$0xff]
    %v2402 = vld [vmem:[#allocation11 + $0x18] sm:$0xff]
    %v2403 = vld [vmem:[%s8] sm:$0x1]
    %v2405 = vlaneseq
    %v2406 = vshrl.u32 %v2405, 7
    %v2407 = vsub.s32 0, %v2406
    %v2408 = vrot.slane %v2403, %v2407
    %2411 = vrot.lane.b32.xlu0 %v2398, 32
    %v2412 = vpop.permute.xlu0 %2411
    %v2413 = vsel %vm221, %v2412, 0
    %2415 = vmatprep.subr.mxu0 0.0
    %2416 = vmatpush1.msra.mxu0 %v2399
    %2417 = vmatprep.subr.mxu0 0.0
    %2418 = vmatpush1.msra.mxu0 %v2400
    %2419 = vmatprep.subr.mxu0 0.0
    %2420 = vmatpush1.msra.mxu0 %v2401
    %2421 = vmatprep.subr.mxu0 0.0
    %2422 = vmatpush1.msra.mxu0 %v2402
    %2423 = vmatprep.subr.mxu0 0.0
    %2424 = vmatpush1.msra.mxu0 0.0
    %2425 = vmatprep.subr.mxu0 0.0
    %2426 = vmatpush1.msra.mxu0 0.0
    %2427 = vmatprep.subr.mxu0 0.0
    %2428 = vmatpush1.msra.mxu0 0.0
    %2429 = vmatprep.subr.mxu0 0.0
    %2430 = vmatpush1.msra.mxu0 0.0
    %2431 = vmatprep.subr.mxu0 0.0
    %2432 = vmatpush1.msra.mxu0 0.0
    %2433 = vmatprep.subr.mxu0 0.0
    %2434 = vmatpush1.msra.mxu0 0.0
    %2435 = vmatprep.subr.mxu0 0.0
    %2436 = vmatpush1.msra.mxu0 0.0
    %2437 = vmatprep.subr.mxu0 0.0
    %2438 = vmatpush1.msra.mxu0 0.0
    %2439 = vmatprep.subr.mxu0 0.0
    %2440 = vmatpush1.msra.mxu0 0.0
    %2441 = vmatprep.subr.mxu0 0.0
    %2442 = vmatpush1.msra.mxu0 0.0
    %2443 = vmatprep.subr.mxu0 0.0
    %2444 = vmatpush1.msra.mxu0 0.0
    %2445 = vmatprep.subr.mxu0 0.0
    %2446 = vmatpush1.msra.mxu0 0.0
    %2447 = vmatprep.subr.mxu0 0.0
    %2448 = vmatpush1.msra.mxu0 0.0
    %2449 = vmatprep.subr.mxu0 0.0
    %2450 = vmatpush1.msra.mxu0 0.0
    %2451 = vmatprep.subr.mxu0 0.0
    %2452 = vmatpush1.msra.mxu0 0.0
    %2453 = vmatprep.subr.mxu0 0.0
    %2454 = vmatpush1.msra.mxu0 0.0
    %2455 = vmatprep.subr.mxu0 0.0
    %2456 = vmatpush1.msra.mxu0 0.0
    %2457 = vmatprep.subr.mxu0 0.0
    %2458 = vmatpush1.msra.mxu0 0.0
    %2459 = vmatprep.subr.mxu0 0.0
    %2460 = vmatpush1.msra.mxu0 0.0
    %2461 = vmatprep.subr.mxu0 0.0
    %2462 = vmatpush1.msra.mxu0 0.0
    %2463 = vmatprep.subr.mxu0 0.0
    %2464 = vmatpush1.msra.mxu0 0.0
    %2465 = vmatprep.subr.mxu0 0.0
    %2466 = vmatpush1.msra.mxu0 0.0
    %2467 = vmatprep.subr.mxu0 0.0
    %2468 = vmatpush1.msra.mxu0 0.0
    %2469 = vmatprep.subr.mxu0 0.0
    %2470 = vmatpush1.msra.mxu0 0.0
    %2471 = vmatprep.subr.mxu0 0.0
    %2472 = vmatpush1.msra.mxu0 0.0
    %2473 = vmatprep.subr.mxu0 0.0
    %2474 = vmatpush1.msra.mxu0 0.0
    %2475 = vmatprep.subr.mxu0 0.0
    %2476 = vmatpush1.msra.mxu0 0.0
    %2477 = vmatprep.subr.mxu0 0.0
    %2478 = vmatpush1.msra.mxu0 0.0
    %2479 = vmatprep.mubr.f32.mxu0 0.0
    %2480 = vmatmul.mubr.f32.gmra.mrb[0].mxu0 %v2413
    %v2481 = vpop.f32.mrb[0].mxu0
    %v2482 = vadd.f32 %v2408, %v2481
    %v2483 = vpop.f32.mrb[0].mxu0
    %2484 = vdwg.mxu0
    %2485 = vst [vmem:[#allocation13] sm:$0x3] %v2482
    // Predicated region
    $region62: #{tpu_custom_call.1} parent=1 // pred_check
      _
    $region63: #{tpu_custom_call.1} parent=1 // pred_check_branch
      %2487 = sbr.rel (0) target = $region65
    $region64: #{tpu_custom_call.1} parent=1 // pred_region
      %s2489 = ssub.s32 32, 32
      %2490 = vsyncadd [#allocation4], %s2489
      %s2492 = sshll.u32 [#allocation13], 4
      %s2493 = int_to_ptr.vmem [resolvable:$true] %s2492
      %2495 = dma.vmem_to_hbm [thread:$0]  %s2493, 32, %s9, [#allocation4]
    $region65: #{tpu_custom_call.1} parent=1 // pred_fallthru
      _
    // Predicated region
    $region66: #{tpu_custom_call.1} parent=1 // pred_check
      _
    $region67: #{tpu_custom_call.1} parent=1 // pred_check_branch
      %2497 = sbr.rel (0) target = $region69
    $region68: #{tpu_custom_call.1} parent=1 // pred_region
      %2498 = dma.done [#allocation4], 32
    $region69: #{tpu_custom_call.1} parent=1 // pred_fallthru
      _
    %2499 = vsyncpa [#allocation3], 1
    %2500 = vsyncpa [#allocation6], 1
    %2501 = vsyncpa [#allocation9], 1
    %2502 = vsyncpa [#allocation12], 1
    %2503 = vsyncpa [#allocation4], 1

</llo_original>
